<compile_context>
chip_gen: v7x
topology: tpu7x:2x2x1
jax: 0.10.0
libtpu: 0.0.40
codegen_flags: <defaults>
</compile_context>

<pallas_src>
import math
import functools

import jax
import jax.numpy as jnp
from jax.experimental import pallas as pl
from jax.experimental.pallas import tpu as pltpu


# ------------------------------ fused kernel -------------------------------

def _fused_mha_kernel(q_ref, k_ref, v_ref,
                      wq_ref, bq_ref, wk_ref, bk_ref, wv_ref, bv_ref,
                      wfc_ref, bfc_ref, gamma_ref, beta_ref,
                      o_ref,
                      qp_ref, kp_ref, vp_ref, ow_ref,
                      *, batch, seq_q, seq_k, num_heads, model_dim,
                      add_const, eps, matmul_dtype):
    H, d = num_heads, model_dim          # dim_K == dim_V == model_dim (module constraint)
    Lq, Lk = seq_q, seq_k
    cdt = matmul_dtype
    scale = 1.0 / math.sqrt(model_dim)   # dk == model_dim after the module's .view()

    # ---- q/k/v projections: one wide MXU dot each over ALL batch rows ------
    def proj(x_ref, w_ref, b_ref):
        return jnp.dot(x_ref[...].astype(cdt), w_ref[...].astype(cdt),
                       preferred_element_type=jnp.float32) + b_ref[...]

    q_all = proj(q_ref, wq_ref, bq_ref) * scale      # [B*Lq, H*d]; 1/sqrt(dk) folded into q
    k_all = proj(k_ref, wk_ref, bk_ref)              # [B*Lk, H*d]
    v_all = proj(v_ref, wv_ref, bv_ref)              # [B*Lk, H*d]

    # ---- attention, per batch (B tiny & static) -----------------------------
    for b in range(batch):
        # Head-blocked [H*L, d] staging: row h*L + l holds the reference's
        # .view() row l*H + h.  A pure row permutation of the module's layout;
        # it cancels through softmax-over-queries and attn @ V, and the inverse
        # permutation is applied when writing ow_ref below.  All slice stores
        # are (8, 128)-tile aligned.
        for h in range(H):
            qp_ref[h * Lq:(h + 1) * Lq, :] = q_all[b * Lq:(b + 1) * Lq, h * d:(h + 1) * d]
            kp_ref[h * Lk:(h + 1) * Lk, :] = k_all[b * Lk:(b + 1) * Lk, h * d:(h + 1) * d]
            vp_ref[h * Lk:(h + 1) * Lk, :] = v_all[b * Lk:(b + 1) * Lk, h * d:(h + 1) * d]

        qp = qp_ref[...]
        kp = kp_ref[...]
        vp = vp_ref[...]

        # similarity: [H*Lq, H*Lk] (cross-head products included, as the module does)
        sim = jax.lax.dot_general(qp.astype(cdt), kp.astype(cdt),
                                  (((1,), (1,)), ((), ())),
                                  preferred_element_type=jnp.float32)

        # F.softmax(similarity, dim=1): normalize over the QUERY axis (rows here).
        m = jnp.max(sim, axis=0, keepdims=True)
        e = jnp.exp(sim - m)
        attn = e / jnp.sum(e, axis=0, keepdims=True)
        # TODO(synk): reference module print()s the attention weights; omitted.

        out_hb = jnp.dot(attn.astype(cdt), vp.astype(cdt),
                         preferred_element_type=jnp.float32)          # [H*Lq, d]

        # Un-permute into the module's [Lq, H*d] layout (tile-aligned copies).
        for h in range(H):
            ow_ref[b * Lq:(b + 1) * Lq, h * d:(h + 1) * d] = out_hb[h * Lq:(h + 1) * Lq, :]

    # ---- linear_fc for all batches: one [B*Lq, H*d] @ [H*d, Dm] matmul ------
    y = jnp.dot(ow_ref[...].astype(cdt), wfc_ref[...].astype(cdt),
                preferred_element_type=jnp.float32) + bfc_ref[...]

    # TODO(synk): training-mode nn.Dropout() (p=0.5) has no deterministic
    # equivalent; identity (eval mode) is used instead.

    # layer_norm(batch_size + output) -- the module's scalar-add quirk, reproduced.
    y = y + add_const
    mean = jnp.mean(y, axis=-1, keepdims=True)
    var = jnp.mean(jnp.square(y - mean), axis=-1, keepdims=True)
    yn = (y - mean) * jax.lax.rsqrt(var + eps)
    o_ref[...] = (yn * gamma_ref[...] + beta_ref[...]).astype(o_ref.dtype)


# ----------------------------- forward wrapper ------------------------------

def multi_headed_attention(Q, K, V, params, *, model_dim, num_heads,
                           matmul_dtype=jnp.float32):
    """Mirrors MultiHeadedAttention.forward (mask=None path, eval-mode dropout)."""
    B, Lq, Dm = Q.shape
    _, Lk, _ = K.shape
    H = num_heads
    HD = model_dim * num_heads           # dim_K * num_heads (dim_K == model_dim)
    # residual = Q  # unused in the original module as well

    # Flatten batch into rows so projections are single wide matmuls; the
    # reshapes here and on the output are free layout changes in XLA.
    q2 = Q.reshape(B * Lq, Dm)
    k2 = K.reshape(B * Lk, Dm)
    v2 = V.reshape(B * Lk, Dm)
    bq = params["bq"].reshape(1, HD)
    bk = params["bk"].reshape(1, HD)
    bv = params["bv"].reshape(1, HD)
    bfc = params["bfc"].reshape(1, Dm)
    gamma = params["gamma"].reshape(1, Dm)
    beta = params["beta"].reshape(1, Dm)

    kernel = functools.partial(
        _fused_mha_kernel, batch=B, seq_q=Lq, seq_k=Lk,
        num_heads=num_heads, model_dim=model_dim,
        add_const=float(B), eps=1e-5, matmul_dtype=matmul_dtype)

    flops = int(2 * (B * Lq + 2 * B * Lk) * Dm * HD        # q/k/v projections
                + 4 * B * (H * Lq) * (H * Lk) * Dm          # sim + attn@V
                + 2 * B * Lq * HD * Dm)                      # linear_fc
    transcendentals = int(B * (H * Lq) * (H * Lk))           # exp in softmax
    bytes_accessed = int(4 * (B * Lq * Dm + 2 * B * Lk * Dm
                              + 3 * (Dm * HD + HD) + HD * Dm + 3 * Dm
                              + B * Lq * Dm))

    out2 = pl.pallas_call(
        kernel,
        out_shape=jax.ShapeDtypeStruct((B * Lq, Dm), jnp.float32),
        # No grid: single invocation, whole (small) operands resident in VMEM.
        scratch_shapes=[
            pltpu.VMEM((H * Lq, model_dim), jnp.float32),    # q, head-blocked
            pltpu.VMEM((H * Lk, model_dim), jnp.float32),    # k, head-blocked
            pltpu.VMEM((H * Lk, model_dim), jnp.float32),    # v, head-blocked
            pltpu.VMEM((B * Lq, HD), jnp.float32),           # attn out, module layout
        ],
        cost_estimate=pl.CostEstimate(flops=flops,
                                      transcendentals=transcendentals,
                                      bytes_accessed=bytes_accessed),
    )(q2, k2, v2, params["wq"], bq, params["wk"], bk, params["wv"], bv,
      params["wfc"], bfc, gamma, beta)

    return out2.reshape(B, Lq, model_dim)


# ----------------------------- pure-JAX reference ---------------------------

def reference_forward(Q, K, V, params, *, model_dim, num_heads):
    hp = jax.lax.Precision.HIGHEST       # accurate f32 reference on TPU
    B = Q.shape[0]
    q = jnp.einsum("bld,df->blf", Q, params["wq"], precision=hp) + params["bq"]
    k = jnp.einsum("bld,df->blf", K, params["wk"], precision=hp) + params["bk"]
    v = jnp.einsum("bld,df->blf", V, params["wv"], precision=hp) + params["bv"]
    q = q.reshape(B, -1, model_dim)
    k = k.reshape(B, -1, model_dim)
    v = v.reshape(B, -1, model_dim)
    sim = jnp.einsum("bqd,bkd->bqk", q, k, precision=hp) / math.sqrt(model_dim)
    attn = jax.nn.softmax(sim, axis=1)    # dim=1, query axis (as in the module)
    out = jnp.einsum("bqk,bkd->bqd", attn, v, precision=hp)
    out = out.reshape(B, -1, model_dim * num_heads)
    y = jnp.einsum("blf,fd->bld", out, params["wfc"], precision=hp) + params["bfc"]
    y = y + float(B)                      # layer_norm(batch_size + output)
    mean = jnp.mean(y, axis=-1, keepdims=True)
    var = jnp.mean(jnp.square(y - mean), axis=-1, keepdims=True)
    yn = (y - mean) / jnp.sqrt(var + 1e-5)
    return yn * params["gamma"] + params["beta"]


# ---------------------------------- main ------------------------------------

if __name__ == "__main__":
    # Small but TPU-friendly configuration (dim_K == dim_V == model_dim is
    # required by the reference module's views / linear_fc). model_dim=128
    # keeps every contraction and the output slab 128-lane dense.
    B, Lq, Lk = 2, 8, 8
    model_dim = 128
    num_heads = 4
    dim_K = dim_V = model_dim

    key = jax.random.PRNGKey(0)
    keys = jax.random.split(key, 11)

    def init_w(k, shape, s=0.05):
        return (s * jax.random.normal(k, shape)).astype(jnp.float32)

    params = {
        "wq": init_w(keys[0], (model_dim, dim_K * num_heads)),
        "bq": init_w(keys[1], (dim_K * num_heads,), 0.01),
        "wk": init_w(keys[2], (model_dim, dim_K * num_heads)),
        "bk": init_w(keys[3], (dim_K * num_heads,), 0.01),
        "wv": init_w(keys[4], (model_dim, dim_V * num_heads)),
        "bv": init_w(keys[5], (dim_V * num_heads,), 0.01),
        "wfc": init_w(keys[6], (dim_V * num_heads, model_dim)),
        "bfc": init_w(keys[7], (model_dim,), 0.01),
        "gamma": jnp.ones((model_dim,), jnp.float32),
        "beta": jnp.zeros((model_dim,), jnp.float32),
    }

    Q = jax.random.normal(keys[8], (B, Lq, model_dim), dtype=jnp.float32)
    K = jax.random.normal(keys[9], (B, Lk, model_dim), dtype=jnp.float32)
    V = jax.random.normal(keys[10], (B, Lk, model_dim), dtype=jnp.float32)

    out = multi_headed_attention(Q, K, V, params, model_dim=model_dim,
                                 num_heads=num_heads)   # matmul_dtype=jnp.bfloat16 for v5e/v6e speed
    out = jax.block_until_ready(out)

    ref = reference_forward(Q, K, V, params, model_dim=model_dim,
                            num_heads=num_heads)
    assert out.shape == (B, Lq, model_dim), out.shape

    # Post-LayerNorm values are O(1); tolerance covers MXU f32-matmul rounding
    # only (a logic/permutation error would show up as O(1) differences).
    max_err = float(jnp.max(jnp.abs(out - ref)))
    assert max_err < 2e-2, f"mismatch vs reference: max abs err = {max_err}"

    print("KERNEL_OK")
</pallas_src>

<mosaic_0001>
module attributes {stable_mosaic.version = 11 : i64} {
  func.func @_fused_mha_kernel(%arg0: memref<16x128xf32, #tpu.memory_space<vmem>>, %arg1: memref<16x128xf32, #tpu.memory_space<vmem>>, %arg2: memref<16x128xf32, #tpu.memory_space<vmem>>, %arg3: memref<128x512xf32, #tpu.memory_space<vmem>>, %arg4: memref<1x512xf32, #tpu.memory_space<vmem>>, %arg5: memref<128x512xf32, #tpu.memory_space<vmem>>, %arg6: memref<1x512xf32, #tpu.memory_space<vmem>>, %arg7: memref<128x512xf32, #tpu.memory_space<vmem>>, %arg8: memref<1x512xf32, #tpu.memory_space<vmem>>, %arg9: memref<512x128xf32, #tpu.memory_space<vmem>>, %arg10: memref<1x128xf32, #tpu.memory_space<vmem>>, %arg11: memref<1x128xf32, #tpu.memory_space<vmem>>, %arg12: memref<1x128xf32, #tpu.memory_space<vmem>>, %arg13: memref<16x128xf32, #tpu.memory_space<vmem>>, %arg14: memref<32x128xf32, #tpu.memory_space<vmem>>, %arg15: memref<32x128xf32, #tpu.memory_space<vmem>>, %arg16: memref<32x128xf32, #tpu.memory_space<vmem>>, %arg17: memref<16x512xf32, #tpu.memory_space<vmem>>) attributes {dimension_semantics = [], scalar_prefetch = 0 : i64, scratch_operands = 4 : i64, tpu.core_type = #tpu.core_type<tc>} {
    %c0 = arith.constant 0 : index
    %c0_0 = arith.constant 0 : index
    %0 = vector.load %arg0[%c0, %c0_0] : memref<16x128xf32, #tpu.memory_space<vmem>>, vector<16x128xf32>
    %c0_1 = arith.constant 0 : index
    %c0_2 = arith.constant 0 : index
    %1 = vector.load %arg3[%c0_1, %c0_2] : memref<128x512xf32, #tpu.memory_space<vmem>>, vector<128x512xf32>
    %cst = arith.constant dense<0.000000e+00> : vector<16x512xf32>
    %2 = tpu.matmul %0, %1, %cst {dimension_numbers = #tpu.dot_dimension_numbers<[1], [0], [0], [1], [0, 0, 1, 1], [], []>} : vector<16x128xf32>, vector<128x512xf32>, vector<16x512xf32> -> vector<16x512xf32>
    %c0_3 = arith.constant 0 : index
    %c0_4 = arith.constant 0 : index
    %3 = vector.load %arg4[%c0_3, %c0_4] : memref<1x512xf32, #tpu.memory_space<vmem>>, vector<1x512xf32>
    %4 = vector.broadcast %3 : vector<1x512xf32> to vector<16x512xf32>
    %5 = arith.addf %2, %4 : vector<16x512xf32>
    %cst_5 = arith.constant 0.0883883461 : f32
    %6 = vector.broadcast %cst_5 : f32 to vector<16x512xf32>
    %7 = arith.mulf %5, %6 : vector<16x512xf32>
    %c0_6 = arith.constant 0 : index
    %c0_7 = arith.constant 0 : index
    %8 = vector.load %arg1[%c0_6, %c0_7] : memref<16x128xf32, #tpu.memory_space<vmem>>, vector<16x128xf32>
    %c0_8 = arith.constant 0 : index
    %c0_9 = arith.constant 0 : index
    %9 = vector.load %arg5[%c0_8, %c0_9] : memref<128x512xf32, #tpu.memory_space<vmem>>, vector<128x512xf32>
    %cst_10 = arith.constant dense<0.000000e+00> : vector<16x512xf32>
    %10 = tpu.matmul %8, %9, %cst_10 {dimension_numbers = #tpu.dot_dimension_numbers<[1], [0], [0], [1], [0, 0, 1, 1], [], []>} : vector<16x128xf32>, vector<128x512xf32>, vector<16x512xf32> -> vector<16x512xf32>
    %c0_11 = arith.constant 0 : index
    %c0_12 = arith.constant 0 : index
    %11 = vector.load %arg6[%c0_11, %c0_12] : memref<1x512xf32, #tpu.memory_space<vmem>>, vector<1x512xf32>
    %12 = vector.broadcast %11 : vector<1x512xf32> to vector<16x512xf32>
    %13 = arith.addf %10, %12 : vector<16x512xf32>
    %c0_13 = arith.constant 0 : index
    %c0_14 = arith.constant 0 : index
    %14 = vector.load %arg2[%c0_13, %c0_14] : memref<16x128xf32, #tpu.memory_space<vmem>>, vector<16x128xf32>
    %c0_15 = arith.constant 0 : index
    %c0_16 = arith.constant 0 : index
    %15 = vector.load %arg7[%c0_15, %c0_16] : memref<128x512xf32, #tpu.memory_space<vmem>>, vector<128x512xf32>
    %cst_17 = arith.constant dense<0.000000e+00> : vector<16x512xf32>
    %16 = tpu.matmul %14, %15, %cst_17 {dimension_numbers = #tpu.dot_dimension_numbers<[1], [0], [0], [1], [0, 0, 1, 1], [], []>} : vector<16x128xf32>, vector<128x512xf32>, vector<16x512xf32> -> vector<16x512xf32>
    %c0_18 = arith.constant 0 : index
    %c0_19 = arith.constant 0 : index
    %17 = vector.load %arg8[%c0_18, %c0_19] : memref<1x512xf32, #tpu.memory_space<vmem>>, vector<1x512xf32>
    %18 = vector.broadcast %17 : vector<1x512xf32> to vector<16x512xf32>
    %19 = arith.addf %16, %18 : vector<16x512xf32>
    %20 = vector.extract_strided_slice %7 {offsets = [0, 0], sizes = [8, 128], strides = [1, 1]} : vector<16x512xf32> to vector<8x128xf32>
    %c0_20 = arith.constant 0 : index
    %c0_21 = arith.constant 0 : index
    %21 = vector.load %arg14[%c0_20, %c0_21] : memref<32x128xf32, #tpu.memory_space<vmem>>, vector<8x128xf32>
    tpu.vector_store %arg14[%c0_20, %c0_21], %20 {strides = array<i32>} : memref<32x128xf32, #tpu.memory_space<vmem>>, vector<8x128xf32>,
    %22 = vector.extract_strided_slice %13 {offsets = [0, 0], sizes = [8, 128], strides = [1, 1]} : vector<16x512xf32> to vector<8x128xf32>
    %c0_22 = arith.constant 0 : index
    %c0_23 = arith.constant 0 : index
    %23 = vector.load %arg15[%c0_22, %c0_23] : memref<32x128xf32, #tpu.memory_space<vmem>>, vector<8x128xf32>
    tpu.vector_store %arg15[%c0_22, %c0_23], %22 {strides = array<i32>} : memref<32x128xf32, #tpu.memory_space<vmem>>, vector<8x128xf32>,
    %24 = vector.extract_strided_slice %19 {offsets = [0, 0], sizes = [8, 128], strides = [1, 1]} : vector<16x512xf32> to vector<8x128xf32>
    %c0_24 = arith.constant 0 : index
    %c0_25 = arith.constant 0 : index
    %25 = vector.load %arg16[%c0_24, %c0_25] : memref<32x128xf32, #tpu.memory_space<vmem>>, vector<8x128xf32>
    tpu.vector_store %arg16[%c0_24, %c0_25], %24 {strides = array<i32>} : memref<32x128xf32, #tpu.memory_space<vmem>>, vector<8x128xf32>,
    %26 = vector.extract_strided_slice %7 {offsets = [0, 128], sizes = [8, 128], strides = [1, 1]} : vector<16x512xf32> to vector<8x128xf32>
    %c8 = arith.constant 8 : index
    %c0_26 = arith.constant 0 : index
    %27 = vector.load %arg14[%c8, %c0_26] : memref<32x128xf32, #tpu.memory_space<vmem>>, vector<8x128xf32>
    tpu.vector_store %arg14[%c8, %c0_26], %26 {strides = array<i32>} : memref<32x128xf32, #tpu.memory_space<vmem>>, vector<8x128xf32>,
    %28 = vector.extract_strided_slice %13 {offsets = [0, 128], sizes = [8, 128], strides = [1, 1]} : vector<16x512xf32> to vector<8x128xf32>
    %c8_27 = arith.constant 8 : index
    %c0_28 = arith.constant 0 : index
    %29 = vector.load %arg15[%c8_27, %c0_28] : memref<32x128xf32, #tpu.memory_space<vmem>>, vector<8x128xf32>
    tpu.vector_store %arg15[%c8_27, %c0_28], %28 {strides = array<i32>} : memref<32x128xf32, #tpu.memory_space<vmem>>, vector<8x128xf32>,
    %30 = vector.extract_strided_slice %19 {offsets = [0, 128], sizes = [8, 128], strides = [1, 1]} : vector<16x512xf32> to vector<8x128xf32>
    %c8_29 = arith.constant 8 : index
    %c0_30 = arith.constant 0 : index
    %31 = vector.load %arg16[%c8_29, %c0_30] : memref<32x128xf32, #tpu.memory_space<vmem>>, vector<8x128xf32>
    tpu.vector_store %arg16[%c8_29, %c0_30], %30 {strides = array<i32>} : memref<32x128xf32, #tpu.memory_space<vmem>>, vector<8x128xf32>,
    %32 = vector.extract_strided_slice %7 {offsets = [0, 256], sizes = [8, 128], strides = [1, 1]} : vector<16x512xf32> to vector<8x128xf32>
    %c16 = arith.constant 16 : index
    %c0_31 = arith.constant 0 : index
    %33 = vector.load %arg14[%c16, %c0_31] : memref<32x128xf32, #tpu.memory_space<vmem>>, vector<8x128xf32>
    tpu.vector_store %arg14[%c16, %c0_31], %32 {strides = array<i32>} : memref<32x128xf32, #tpu.memory_space<vmem>>, vector<8x128xf32>,
    %34 = vector.extract_strided_slice %13 {offsets = [0, 256], sizes = [8, 128], strides = [1, 1]} : vector<16x512xf32> to vector<8x128xf32>
    %c16_32 = arith.constant 16 : index
    %c0_33 = arith.constant 0 : index
    %35 = vector.load %arg15[%c16_32, %c0_33] : memref<32x128xf32, #tpu.memory_space<vmem>>, vector<8x128xf32>
    tpu.vector_store %arg15[%c16_32, %c0_33], %34 {strides = array<i32>} : memref<32x128xf32, #tpu.memory_space<vmem>>, vector<8x128xf32>,
    %36 = vector.extract_strided_slice %19 {offsets = [0, 256], sizes = [8, 128], strides = [1, 1]} : vector<16x512xf32> to vector<8x128xf32>
    %c16_34 = arith.constant 16 : index
    %c0_35 = arith.constant 0 : index
    %37 = vector.load %arg16[%c16_34, %c0_35] : memref<32x128xf32, #tpu.memory_space<vmem>>, vector<8x128xf32>
    tpu.vector_store %arg16[%c16_34, %c0_35], %36 {strides = array<i32>} : memref<32x128xf32, #tpu.memory_space<vmem>>, vector<8x128xf32>,
    %38 = vector.extract_strided_slice %7 {offsets = [0, 384], sizes = [8, 128], strides = [1, 1]} : vector<16x512xf32> to vector<8x128xf32>
    %c24 = arith.constant 24 : index
    %c0_36 = arith.constant 0 : index
    %39 = vector.load %arg14[%c24, %c0_36] : memref<32x128xf32, #tpu.memory_space<vmem>>, vector<8x128xf32>
    tpu.vector_store %arg14[%c24, %c0_36], %38 {strides = array<i32>} : memref<32x128xf32, #tpu.memory_space<vmem>>, vector<8x128xf32>,
    %40 = vector.extract_strided_slice %13 {offsets = [0, 384], sizes = [8, 128], strides = [1, 1]} : vector<16x512xf32> to vector<8x128xf32>
    %c24_37 = arith.constant 24 : index
    %c0_38 = arith.constant 0 : index
    %41 = vector.load %arg15[%c24_37, %c0_38] : memref<32x128xf32, #tpu.memory_space<vmem>>, vector<8x128xf32>
    tpu.vector_store %arg15[%c24_37, %c0_38], %40 {strides = array<i32>} : memref<32x128xf32, #tpu.memory_space<vmem>>, vector<8x128xf32>,
    %42 = vector.extract_strided_slice %19 {offsets = [0, 384], sizes = [8, 128], strides = [1, 1]} : vector<16x512xf32> to vector<8x128xf32>
    %c24_39 = arith.constant 24 : index
    %c0_40 = arith.constant 0 : index
    %43 = vector.load %arg16[%c24_39, %c0_40] : memref<32x128xf32, #tpu.memory_space<vmem>>, vector<8x128xf32>
    tpu.vector_store %arg16[%c24_39, %c0_40], %42 {strides = array<i32>} : memref<32x128xf32, #tpu.memory_space<vmem>>, vector<8x128xf32>,
    %c0_41 = arith.constant 0 : index
    %c0_42 = arith.constant 0 : index
    %44 = vector.load %arg14[%c0_41, %c0_42] : memref<32x128xf32, #tpu.memory_space<vmem>>, vector<32x128xf32>
    %c0_43 = arith.constant 0 : index
    %c0_44 = arith.constant 0 : index
    %45 = vector.load %arg15[%c0_43, %c0_44] : memref<32x128xf32, #tpu.memory_space<vmem>>, vector<32x128xf32>
    %c0_45 = arith.constant 0 : index
    %c0_46 = arith.constant 0 : index
    %46 = vector.load %arg16[%c0_45, %c0_46] : memref<32x128xf32, #tpu.memory_space<vmem>>, vector<32x128xf32>
    %cst_47 = arith.constant dense<0.000000e+00> : vector<32x32xf32>
    %47 = tpu.matmul %44, %45, %cst_47 {dimension_numbers = #tpu.dot_dimension_numbers<[1], [1], [0], [0], [0, 0, 1, 0], [], []>} : vector<32x128xf32>, vector<32x128xf32>, vector<32x32xf32> -> vector<32x32xf32>
    %cst_48 = arith.constant dense<0xFF800000> : vector<32xf32>
    %48 = vector.multi_reduction <maximumf>, %47, %cst_48 [0] : vector<32x32xf32> to vector<32xf32>
    %49 = vector.shape_cast %48 : vector<32xf32> to vector<1x32xf32>
    %50 = vector.broadcast %49 : vector<1x32xf32> to vector<32x32xf32>
    %51 = arith.subf %47, %50 : vector<32x32xf32>
    %52 = math.exp %51 : vector<32x32xf32>
    %cst_49 = arith.constant dense<0.000000e+00> : vector<32xf32>
    %53 = vector.multi_reduction <add>, %52, %cst_49 [0] : vector<32x32xf32> to vector<32xf32>
    %54 = vector.shape_cast %53 : vector<32xf32> to vector<1x32xf32>
    %55 = vector.broadcast %54 : vector<1x32xf32> to vector<32x32xf32>
    %56 = arith.divf %52, %55 : vector<32x32xf32>
    %cst_50 = arith.constant dense<0.000000e+00> : vector<32x128xf32>
    %57 = tpu.matmul %56, %46, %cst_50 {dimension_numbers = #tpu.dot_dimension_numbers<[1], [0], [0], [1], [0, 0, 1, 1], [], []>} : vector<32x32xf32>, vector<32x128xf32>, vector<32x128xf32> -> vector<32x128xf32>
    %58 = vector.extract_strided_slice %57 {offsets = [0, 0], sizes = [8, 128], strides = [1, 1]} : vector<32x128xf32> to vector<8x128xf32>
    %c0_51 = arith.constant 0 : index
    %c0_52 = arith.constant 0 : index
    %59 = vector.load %arg17[%c0_51, %c0_52] : memref<16x512xf32, #tpu.memory_space<vmem>>, vector<8x128xf32>
    tpu.vector_store %arg17[%c0_51, %c0_52], %58 {strides = array<i32>} : memref<16x512xf32, #tpu.memory_space<vmem>>, vector<8x128xf32>,
    %60 = vector.extract_strided_slice %57 {offsets = [8, 0], sizes = [8, 128], strides = [1, 1]} : vector<32x128xf32> to vector<8x128xf32>
    %c0_53 = arith.constant 0 : index
    %c128 = arith.constant 128 : index
    %61 = vector.load %arg17[%c0_53, %c128] : memref<16x512xf32, #tpu.memory_space<vmem>>, vector<8x128xf32>
    tpu.vector_store %arg17[%c0_53, %c128], %60 {strides = array<i32>} : memref<16x512xf32, #tpu.memory_space<vmem>>, vector<8x128xf32>,
    %62 = vector.extract_strided_slice %57 {offsets = [16, 0], sizes = [8, 128], strides = [1, 1]} : vector<32x128xf32> to vector<8x128xf32>
    %c0_54 = arith.constant 0 : index
    %c256 = arith.constant 256 : index
    %63 = vector.load %arg17[%c0_54, %c256] : memref<16x512xf32, #tpu.memory_space<vmem>>, vector<8x128xf32>
    tpu.vector_store %arg17[%c0_54, %c256], %62 {strides = array<i32>} : memref<16x512xf32, #tpu.memory_space<vmem>>, vector<8x128xf32>,
    %64 = vector.extract_strided_slice %57 {offsets = [24, 0], sizes = [8, 128], strides = [1, 1]} : vector<32x128xf32> to vector<8x128xf32>
    %c0_55 = arith.constant 0 : index
    %c384 = arith.constant 384 : index
    %65 = vector.load %arg17[%c0_55, %c384] : memref<16x512xf32, #tpu.memory_space<vmem>>, vector<8x128xf32>
    tpu.vector_store %arg17[%c0_55, %c384], %64 {strides = array<i32>} : memref<16x512xf32, #tpu.memory_space<vmem>>, vector<8x128xf32>,
    %66 = vector.extract_strided_slice %7 {offsets = [8, 0], sizes = [8, 128], strides = [1, 1]} : vector<16x512xf32> to vector<8x128xf32>
    %c0_56 = arith.constant 0 : index
    %c0_57 = arith.constant 0 : index
    %67 = vector.load %arg14[%c0_56, %c0_57] : memref<32x128xf32, #tpu.memory_space<vmem>>, vector<8x128xf32>
    tpu.vector_store %arg14[%c0_56, %c0_57], %66 {strides = array<i32>} : memref<32x128xf32, #tpu.memory_space<vmem>>, vector<8x128xf32>,
    %68 = vector.extract_strided_slice %13 {offsets = [8, 0], sizes = [8, 128], strides = [1, 1]} : vector<16x512xf32> to vector<8x128xf32>
    %c0_58 = arith.constant 0 : index
    %c0_59 = arith.constant 0 : index
    %69 = vector.load %arg15[%c0_58, %c0_59] : memref<32x128xf32, #tpu.memory_space<vmem>>, vector<8x128xf32>
    tpu.vector_store %arg15[%c0_58, %c0_59], %68 {strides = array<i32>} : memref<32x128xf32, #tpu.memory_space<vmem>>, vector<8x128xf32>,
    %70 = vector.extract_strided_slice %19 {offsets = [8, 0], sizes = [8, 128], strides = [1, 1]} : vector<16x512xf32> to vector<8x128xf32>
    %c0_60 = arith.constant 0 : index
    %c0_61 = arith.constant 0 : index
    %71 = vector.load %arg16[%c0_60, %c0_61] : memref<32x128xf32, #tpu.memory_space<vmem>>, vector<8x128xf32>
    tpu.vector_store %arg16[%c0_60, %c0_61], %70 {strides = array<i32>} : memref<32x128xf32, #tpu.memory_space<vmem>>, vector<8x128xf32>,
    %72 = vector.extract_strided_slice %7 {offsets = [8, 128], sizes = [8, 128], strides = [1, 1]} : vector<16x512xf32> to vector<8x128xf32>
    %c8_62 = arith.constant 8 : index
    %c0_63 = arith.constant 0 : index
    %73 = vector.load %arg14[%c8_62, %c0_63] : memref<32x128xf32, #tpu.memory_space<vmem>>, vector<8x128xf32>
    tpu.vector_store %arg14[%c8_62, %c0_63], %72 {strides = array<i32>} : memref<32x128xf32, #tpu.memory_space<vmem>>, vector<8x128xf32>,
    %74 = vector.extract_strided_slice %13 {offsets = [8, 128], sizes = [8, 128], strides = [1, 1]} : vector<16x512xf32> to vector<8x128xf32>
    %c8_64 = arith.constant 8 : index
    %c0_65 = arith.constant 0 : index
    %75 = vector.load %arg15[%c8_64, %c0_65] : memref<32x128xf32, #tpu.memory_space<vmem>>, vector<8x128xf32>
    tpu.vector_store %arg15[%c8_64, %c0_65], %74 {strides = array<i32>} : memref<32x128xf32, #tpu.memory_space<vmem>>, vector<8x128xf32>,
    %76 = vector.extract_strided_slice %19 {offsets = [8, 128], sizes = [8, 128], strides = [1, 1]} : vector<16x512xf32> to vector<8x128xf32>
    %c8_66 = arith.constant 8 : index
    %c0_67 = arith.constant 0 : index
    %77 = vector.load %arg16[%c8_66, %c0_67] : memref<32x128xf32, #tpu.memory_space<vmem>>, vector<8x128xf32>
    tpu.vector_store %arg16[%c8_66, %c0_67], %76 {strides = array<i32>} : memref<32x128xf32, #tpu.memory_space<vmem>>, vector<8x128xf32>,
    %78 = vector.extract_strided_slice %7 {offsets = [8, 256], sizes = [8, 128], strides = [1, 1]} : vector<16x512xf32> to vector<8x128xf32>
    %c16_68 = arith.constant 16 : index
    %c0_69 = arith.constant 0 : index
    %79 = vector.load %arg14[%c16_68, %c0_69] : memref<32x128xf32, #tpu.memory_space<vmem>>, vector<8x128xf32>
    tpu.vector_store %arg14[%c16_68, %c0_69], %78 {strides = array<i32>} : memref<32x128xf32, #tpu.memory_space<vmem>>, vector<8x128xf32>,
    %80 = vector.extract_strided_slice %13 {offsets = [8, 256], sizes = [8, 128], strides = [1, 1]} : vector<16x512xf32> to vector<8x128xf32>
    %c16_70 = arith.constant 16 : index
    %c0_71 = arith.constant 0 : index
    %81 = vector.load %arg15[%c16_70, %c0_71] : memref<32x128xf32, #tpu.memory_space<vmem>>, vector<8x128xf32>
    tpu.vector_store %arg15[%c16_70, %c0_71], %80 {strides = array<i32>} : memref<32x128xf32, #tpu.memory_space<vmem>>, vector<8x128xf32>,
    %82 = vector.extract_strided_slice %19 {offsets = [8, 256], sizes = [8, 128], strides = [1, 1]} : vector<16x512xf32> to vector<8x128xf32>
    %c16_72 = arith.constant 16 : index
    %c0_73 = arith.constant 0 : index
    %83 = vector.load %arg16[%c16_72, %c0_73] : memref<32x128xf32, #tpu.memory_space<vmem>>, vector<8x128xf32>
    tpu.vector_store %arg16[%c16_72, %c0_73], %82 {strides = array<i32>} : memref<32x128xf32, #tpu.memory_space<vmem>>, vector<8x128xf32>,
    %84 = vector.extract_strided_slice %7 {offsets = [8, 384], sizes = [8, 128], strides = [1, 1]} : vector<16x512xf32> to vector<8x128xf32>
    %c24_74 = arith.constant 24 : index
    %c0_75 = arith.constant 0 : index
    %85 = vector.load %arg14[%c24_74, %c0_75] : memref<32x128xf32, #tpu.memory_space<vmem>>, vector<8x128xf32>
    tpu.vector_store %arg14[%c24_74, %c0_75], %84 {strides = array<i32>} : memref<32x128xf32, #tpu.memory_space<vmem>>, vector<8x128xf32>,
    %86 = vector.extract_strided_slice %13 {offsets = [8, 384], sizes = [8, 128], strides = [1, 1]} : vector<16x512xf32> to vector<8x128xf32>
    %c24_76 = arith.constant 24 : index
    %c0_77 = arith.constant 0 : index
    %87 = vector.load %arg15[%c24_76, %c0_77] : memref<32x128xf32, #tpu.memory_space<vmem>>, vector<8x128xf32>
    tpu.vector_store %arg15[%c24_76, %c0_77], %86 {strides = array<i32>} : memref<32x128xf32, #tpu.memory_space<vmem>>, vector<8x128xf32>,
    %88 = vector.extract_strided_slice %19 {offsets = [8, 384], sizes = [8, 128], strides = [1, 1]} : vector<16x512xf32> to vector<8x128xf32>
    %c24_78 = arith.constant 24 : index
    %c0_79 = arith.constant 0 : index
    %89 = vector.load %arg16[%c24_78, %c0_79] : memref<32x128xf32, #tpu.memory_space<vmem>>, vector<8x128xf32>
    tpu.vector_store %arg16[%c24_78, %c0_79], %88 {strides = array<i32>} : memref<32x128xf32, #tpu.memory_space<vmem>>, vector<8x128xf32>,
    %c0_80 = arith.constant 0 : index
    %c0_81 = arith.constant 0 : index
    %90 = vector.load %arg14[%c0_80, %c0_81] : memref<32x128xf32, #tpu.memory_space<vmem>>, vector<32x128xf32>
    %c0_82 = arith.constant 0 : index
    %c0_83 = arith.constant 0 : index
    %91 = vector.load %arg15[%c0_82, %c0_83] : memref<32x128xf32, #tpu.memory_space<vmem>>, vector<32x128xf32>
    %c0_84 = arith.constant 0 : index
    %c0_85 = arith.constant 0 : index
    %92 = vector.load %arg16[%c0_84, %c0_85] : memref<32x128xf32, #tpu.memory_space<vmem>>, vector<32x128xf32>
    %cst_86 = arith.constant dense<0.000000e+00> : vector<32x32xf32>
    %93 = tpu.matmul %90, %91, %cst_86 {dimension_numbers = #tpu.dot_dimension_numbers<[1], [1], [0], [0], [0, 0, 1, 0], [], []>} : vector<32x128xf32>, vector<32x128xf32>, vector<32x32xf32> -> vector<32x32xf32>
    %cst_87 = arith.constant dense<0xFF800000> : vector<32xf32>
    %94 = vector.multi_reduction <maximumf>, %93, %cst_87 [0] : vector<32x32xf32> to vector<32xf32>
    %95 = vector.shape_cast %94 : vector<32xf32> to vector<1x32xf32>
    %96 = vector.broadcast %95 : vector<1x32xf32> to vector<32x32xf32>
    %97 = arith.subf %93, %96 : vector<32x32xf32>
    %98 = math.exp %97 : vector<32x32xf32>
    %cst_88 = arith.constant dense<0.000000e+00> : vector<32xf32>
    %99 = vector.multi_reduction <add>, %98, %cst_88 [0] : vector<32x32xf32> to vector<32xf32>
    %100 = vector.shape_cast %99 : vector<32xf32> to vector<1x32xf32>
    %101 = vector.broadcast %100 : vector<1x32xf32> to vector<32x32xf32>
    %102 = arith.divf %98, %101 : vector<32x32xf32>
    %cst_89 = arith.constant dense<0.000000e+00> : vector<32x128xf32>
    %103 = tpu.matmul %102, %92, %cst_89 {dimension_numbers = #tpu.dot_dimension_numbers<[1], [0], [0], [1], [0, 0, 1, 1], [], []>} : vector<32x32xf32>, vector<32x128xf32>, vector<32x128xf32> -> vector<32x128xf32>
    %104 = vector.extract_strided_slice %103 {offsets = [0, 0], sizes = [8, 128], strides = [1, 1]} : vector<32x128xf32> to vector<8x128xf32>
    %c8_90 = arith.constant 8 : index
    %c0_91 = arith.constant 0 : index
    %105 = vector.load %arg17[%c8_90, %c0_91] : memref<16x512xf32, #tpu.memory_space<vmem>>, vector<8x128xf32>
    tpu.vector_store %arg17[%c8_90, %c0_91], %104 {strides = array<i32>} : memref<16x512xf32, #tpu.memory_space<vmem>>, vector<8x128xf32>,
    %106 = vector.extract_strided_slice %103 {offsets = [8, 0], sizes = [8, 128], strides = [1, 1]} : vector<32x128xf32> to vector<8x128xf32>
    %c8_92 = arith.constant 8 : index
    %c128_93 = arith.constant 128 : index
    %107 = vector.load %arg17[%c8_92, %c128_93] : memref<16x512xf32, #tpu.memory_space<vmem>>, vector<8x128xf32>
    tpu.vector_store %arg17[%c8_92, %c128_93], %106 {strides = array<i32>} : memref<16x512xf32, #tpu.memory_space<vmem>>, vector<8x128xf32>,
    %108 = vector.extract_strided_slice %103 {offsets = [16, 0], sizes = [8, 128], strides = [1, 1]} : vector<32x128xf32> to vector<8x128xf32>
    %c8_94 = arith.constant 8 : index
    %c256_95 = arith.constant 256 : index
    %109 = vector.load %arg17[%c8_94, %c256_95] : memref<16x512xf32, #tpu.memory_space<vmem>>, vector<8x128xf32>
    tpu.vector_store %arg17[%c8_94, %c256_95], %108 {strides = array<i32>} : memref<16x512xf32, #tpu.memory_space<vmem>>, vector<8x128xf32>,
    %110 = vector.extract_strided_slice %103 {offsets = [24, 0], sizes = [8, 128], strides = [1, 1]} : vector<32x128xf32> to vector<8x128xf32>
    %c8_96 = arith.constant 8 : index
    %c384_97 = arith.constant 384 : index
    %111 = vector.load %arg17[%c8_96, %c384_97] : memref<16x512xf32, #tpu.memory_space<vmem>>, vector<8x128xf32>
    tpu.vector_store %arg17[%c8_96, %c384_97], %110 {strides = array<i32>} : memref<16x512xf32, #tpu.memory_space<vmem>>, vector<8x128xf32>,
    %c0_98 = arith.constant 0 : index
    %c0_99 = arith.constant 0 : index
    %112 = vector.load %arg17[%c0_98, %c0_99] : memref<16x512xf32, #tpu.memory_space<vmem>>, vector<16x512xf32>
    %c0_100 = arith.constant 0 : index
    %c0_101 = arith.constant 0 : index
    %113 = vector.load %arg9[%c0_100, %c0_101] : memref<512x128xf32, #tpu.memory_space<vmem>>, vector<512x128xf32>
    %cst_102 = arith.constant dense<0.000000e+00> : vector<16x128xf32>
    %114 = tpu.matmul %112, %113, %cst_102 {dimension_numbers = #tpu.dot_dimension_numbers<[1], [0], [0], [1], [0, 0, 1, 1], [], []>} : vector<16x512xf32>, vector<512x128xf32>, vector<16x128xf32> -> vector<16x128xf32>
    %c0_103 = arith.constant 0 : index
    %c0_104 = arith.constant 0 : index
    %115 = vector.load %arg10[%c0_103, %c0_104] : memref<1x128xf32, #tpu.memory_space<vmem>>, vector<1x128xf32>
    %116 = vector.broadcast %115 : vector<1x128xf32> to vector<16x128xf32>
    %117 = arith.addf %114, %116 : vector<16x128xf32>
    %cst_105 = arith.constant 2.000000e+00 : f32
    %118 = vector.broadcast %cst_105 : f32 to vector<16x128xf32>
    %119 = arith.addf %117, %118 : vector<16x128xf32>
    %cst_106 = arith.constant dense<0.000000e+00> : vector<16xf32>
    %120 = vector.multi_reduction <add>, %119, %cst_106 [1] : vector<16x128xf32> to vector<16xf32>
    %121 = vector.shape_cast %120 : vector<16xf32> to vector<16x1xf32>
    %cst_107 = arith.constant 1.280000e+02 : f32
    %122 = vector.broadcast %cst_107 : f32 to vector<16x1xf32>
    %123 = arith.divf %121, %122 : vector<16x1xf32>
    %124 = vector.broadcast %123 : vector<16x1xf32> to vector<16x128xf32>
    %125 = arith.subf %119, %124 : vector<16x128xf32>
    %126 = arith.mulf %125, %125 : vector<16x128xf32>
    %cst_108 = arith.constant dense<0.000000e+00> : vector<16xf32>
    %127 = vector.multi_reduction <add>, %126, %cst_108 [1] : vector<16x128xf32> to vector<16xf32>
    %128 = vector.shape_cast %127 : vector<16xf32> to vector<16x1xf32>
    %cst_109 = arith.constant 1.280000e+02 : f32
    %129 = vector.broadcast %cst_109 : f32 to vector<16x1xf32>
    %130 = arith.divf %128, %129 : vector<16x1xf32>
    %131 = vector.broadcast %123 : vector<16x1xf32> to vector<16x128xf32>
    %132 = arith.subf %119, %131 : vector<16x128xf32>
    %cst_110 = arith.constant 9.99999974E-6 : f32
    %133 = vector.broadcast %cst_110 : f32 to vector<16x1xf32>
    %134 = arith.addf %130, %133 : vector<16x1xf32>
    %135 = math.rsqrt %134 : vector<16x1xf32>
    %136 = vector.broadcast %135 : vector<16x1xf32> to vector<16x128xf32>
    %137 = arith.mulf %132, %136 : vector<16x128xf32>
    %c0_111 = arith.constant 0 : index
    %c0_112 = arith.constant 0 : index
    %138 = vector.load %arg11[%c0_111, %c0_112] : memref<1x128xf32, #tpu.memory_space<vmem>>, vector<1x128xf32>
    %139 = vector.broadcast %138 : vector<1x128xf32> to vector<16x128xf32>
    %140 = arith.mulf %137, %139 : vector<16x128xf32>
    %c0_113 = arith.constant 0 : index
    %c0_114 = arith.constant 0 : index
    %141 = vector.load %arg12[%c0_113, %c0_114] : memref<1x128xf32, #tpu.memory_space<vmem>>, vector<1x128xf32>
    %142 = vector.broadcast %141 : vector<1x128xf32> to vector<16x128xf32>
    %143 = arith.addf %140, %142 : vector<16x128xf32>
    %c0_115 = arith.constant 0 : index
    %c0_116 = arith.constant 0 : index
    %144 = vector.load %arg13[%c0_115, %c0_116] : memref<16x128xf32, #tpu.memory_space<vmem>>, vector<16x128xf32>
    tpu.vector_store %arg13[%c0_115, %c0_116], %143 {strides = array<i32>} : memref<16x128xf32, #tpu.memory_space<vmem>>, vector<16x128xf32>,
    return
  }
}

</mosaic_0001>

<llo_original>
// kernel: tpu_custom_call.1
$region0: #{tpu_custom_call.1}
  #allocation0 [shape = 'u32[]', space=smem, size = 0x4, offset = 0x4, fixed_abs, tag = 'smem constant byte address 0x4 - core index']
  #allocation1 [shape = 'u32[144,128]{1,0:T(1,128)}', space=vmem, size = 0x12000, scoped, tag = 'internal scratch']
  #allocation2 [shape = 'f32[32,128]{1,0:T(8,128)}', space=vmem, size = 0x4000, scoped, tag = 'scratch operand']
  #allocation3 [shape = 'f32[32,128]{1,0:T(8,128)}', space=vmem, size = 0x4000, scoped, tag = 'scratch operand']
  #allocation4 [shape = 'f32[32,128]{1,0:T(8,128)}', space=vmem, size = 0x4000, scoped, tag = 'scratch operand']
  #allocation5 [shape = 'f32[16,512]{1,0:T(8,128)}', space=vmem, size = 0x8000, scoped, tag = 'scratch operand']
  %s0 = inlined_call_operand.hbm [shape: f32[16,128], index: 0, kind: input, shape index: {}]
  %s1 = inlined_call_operand.hbm [shape: f32[16,128], index: 1, kind: input, shape index: {}]
  %s2 = inlined_call_operand.hbm [shape: f32[16,128], index: 2, kind: input, shape index: {}]
  %s3 = inlined_call_operand.hbm [shape: f32[128,512], index: 3, kind: input, shape index: {}]
  %s4 = inlined_call_operand.vmem [shape: f32[1,512], index: 4, kind: input, shape index: {}]
  %s5 = inlined_call_operand.hbm [shape: f32[128,512], index: 5, kind: input, shape index: {}]
  %s6 = inlined_call_operand.vmem [shape: f32[1,512], index: 6, kind: input, shape index: {}]
  %s7 = inlined_call_operand.hbm [shape: f32[128,512], index: 7, kind: input, shape index: {}]
  %s8 = inlined_call_operand.vmem [shape: f32[1,512], index: 8, kind: input, shape index: {}]
  %s9 = inlined_call_operand.hbm [shape: f32[512,128], index: 9, kind: input, shape index: {}]
  %s10 = inlined_call_operand.vmem [shape: f32[1,128], index: 10, kind: input, shape index: {}]
  %s11 = inlined_call_operand.vmem [shape: f32[1,128], index: 11, kind: input, shape index: {}]
  %s12 = inlined_call_operand.vmem [shape: f32[1,128], index: 12, kind: input, shape index: {}]
  %s13 = inlined_call_operand.hbm [shape: f32[16,128], index: 13, kind: output, shape index: {}]
  %s14 = sld [smem:[#allocation0]]
  $region90: #{tpu_custom_call.1} parent=0
    _
  %s16 = ssub.s32 1, %s14
  %s17 = scalar_select 0, %s16, %s14
  $region1: #{tpu_custom_call.1} parent=0
    #allocation6 [shape = 'u8[8192]{0}', space=vmem, size = 0x2000, scoped, tag = 'input window, operand 0, single buffered']
    #allocation7 [shape = 's32[1]{0}', space=sflag, size = 0x4, scoped, tag = 'scoped memory for tpu_custom_call.1']
    #allocation8 [shape = 's32[1]{0}', space=sflag, size = 0x4, scoped, tag = 'scoped memory for tpu_custom_call.1']
    #allocation9 [shape = 'u8[8192]{0}', space=vmem, size = 0x2000, scoped, tag = 'input window, operand 1, single buffered']
    #allocation10 [shape = 's32[1]{0}', space=sflag, size = 0x4, scoped, tag = 'scoped memory for tpu_custom_call.1']
    #allocation11 [shape = 'u8[8192]{0}', space=vmem, size = 0x2000, scoped, tag = 'input window, operand 2, single buffered']
    #allocation12 [shape = 'u8[262144]{0}', space=vmem, size = 0x40000, scoped, tag = 'input window, operand 3, single buffered']
    #allocation13 [shape = 's32[1]{0}', space=sflag, size = 0x4, scoped, tag = 'scoped memory for tpu_custom_call.1']
    #allocation14 [shape = 'u8[262144]{0}', space=vmem, size = 0x40000, scoped, tag = 'input window, operand 5, single buffered']
    #allocation15 [shape = 'u8[262144]{0}', space=vmem, size = 0x40000, scoped, tag = 'input window, operand 7, single buffered']
    #allocation16 [shape = 's32[1]{0}', space=sflag, size = 0x4, scoped, tag = 'scoped memory for tpu_custom_call.1']
    #allocation17 [shape = 'u8[262144]{0}', space=vmem, size = 0x40000, scoped, tag = 'input window, operand 9, single buffered']
    #allocation18 [shape = 'u8[8192]{0}', space=vmem, size = 0x2000, scoped, tag = 'output window, operand 0, single buffered']
    %18 = vsyncpa [#allocation7], 0
    %19 = vsyncpa [#allocation10], 0
    %20 = vsyncpa [#allocation13], 0
    %21 = vsyncpa [#allocation16], 0
    %22 = vsyncpa [#allocation8], 0
    // Predicated region
    $region2: #{tpu_custom_call.1} parent=1 // pred_check
      _
    $region3: #{tpu_custom_call.1} parent=1 // pred_check_branch
      %24 = sbr.rel (0) target = $region5
    $region4: #{tpu_custom_call.1} parent=1 // pred_region
      %s26 = ssub.s32 256, 256
      %27 = vsyncadd [#allocation7], %s26
      %s28 = sshll.u32 [#allocation6], 4
      %s29 = int_to_ptr.vmem [resolvable:$true] %s28
      %34 = dma.hbm_to_vmem [thread:$0]  %s0, 256, %s29, [#allocation7], 128, 128, 8
    $region5: #{tpu_custom_call.1} parent=1 // pred_fallthru
      _
    // Predicated region
    $region6: #{tpu_custom_call.1} parent=1 // pred_check
      _
    $region7: #{tpu_custom_call.1} parent=1 // pred_check_branch
      %36 = sbr.rel (0) target = $region9
    $region8: #{tpu_custom_call.1} parent=1 // pred_region
      %s38 = ssub.s32 256, 256
      %39 = vsyncadd [#allocation10], %s38
      %s40 = sshll.u32 [#allocation9], 4
      %s41 = int_to_ptr.vmem [resolvable:$true] %s40
      %46 = dma.hbm_to_vmem [thread:$0]  %s1, 256, %s41, [#allocation10], 128, 128, 8
    $region9: #{tpu_custom_call.1} parent=1 // pred_fallthru
      _
    // Predicated region
    $region10: #{tpu_custom_call.1} parent=1 // pred_check
      _
    $region11: #{tpu_custom_call.1} parent=1 // pred_check_branch
      %48 = sbr.rel (0) target = $region13
    $region12: #{tpu_custom_call.1} parent=1 // pred_region
      %s50 = ssub.s32 256, 256
      %51 = vsyncadd [#allocation10], %s50
      %s52 = sshll.u32 [#allocation11], 4
      %s53 = int_to_ptr.vmem [resolvable:$true] %s52
      %58 = dma.hbm_to_vmem [thread:$0]  %s2, 256, %s53, [#allocation10], 128, 128, 8
    $region13: #{tpu_custom_call.1} parent=1 // pred_fallthru
      _
    // Predicated region
    $region14: #{tpu_custom_call.1} parent=1 // pred_check
      _
    $region15: #{tpu_custom_call.1} parent=1 // pred_check_branch
      %60 = sbr.rel (0) target = $region17
    $region16: #{tpu_custom_call.1} parent=1 // pred_region
      %s62 = ssub.s32 8192, 8192
      %63 = vsyncadd [#allocation13], %s62
      %s64 = sshll.u32 [#allocation12], 4
      %s65 = int_to_ptr.vmem [resolvable:$true] %s64
      %70 = dma.hbm_to_vmem [thread:$0]  %s3, 8192, %s65, [#allocation13], 512, 512, 32
    $region17: #{tpu_custom_call.1} parent=1 // pred_fallthru
      _
    // Predicated region
    $region18: #{tpu_custom_call.1} parent=1 // pred_check
      _
    $region19: #{tpu_custom_call.1} parent=1 // pred_check_branch
      %72 = sbr.rel (0) target = $region21
    $region20: #{tpu_custom_call.1} parent=1 // pred_region
      _
    $region21: #{tpu_custom_call.1} parent=1 // pred_fallthru
      _
    // Predicated region
    $region22: #{tpu_custom_call.1} parent=1 // pred_check
      _
    $region23: #{tpu_custom_call.1} parent=1 // pred_check_branch
      %74 = sbr.rel (0) target = $region25
    $region24: #{tpu_custom_call.1} parent=1 // pred_region
      %s76 = ssub.s32 8192, 8192
      %77 = vsyncadd [#allocation13], %s76
      %s78 = sshll.u32 [#allocation14], 4
      %s79 = int_to_ptr.vmem [resolvable:$true] %s78
      %84 = dma.hbm_to_vmem [thread:$0]  %s5, 8192, %s79, [#allocation13], 512, 512, 32
    $region25: #{tpu_custom_call.1} parent=1 // pred_fallthru
      _
    // Predicated region
    $region26: #{tpu_custom_call.1} parent=1 // pred_check
      _
    $region27: #{tpu_custom_call.1} parent=1 // pred_check_branch
      %86 = sbr.rel (0) target = $region29
    $region28: #{tpu_custom_call.1} parent=1 // pred_region
      _
    $region29: #{tpu_custom_call.1} parent=1 // pred_fallthru
      _
    // Predicated region
    $region30: #{tpu_custom_call.1} parent=1 // pred_check
      _
    $region31: #{tpu_custom_call.1} parent=1 // pred_check_branch
      %88 = sbr.rel (0) target = $region33
    $region32: #{tpu_custom_call.1} parent=1 // pred_region
      %s90 = ssub.s32 8192, 8192
      %91 = vsyncadd [#allocation16], %s90
      %s92 = sshll.u32 [#allocation15], 4
      %s93 = int_to_ptr.vmem [resolvable:$true] %s92
      %98 = dma.hbm_to_vmem [thread:$0]  %s7, 8192, %s93, [#allocation16], 512, 512, 32
    $region33: #{tpu_custom_call.1} parent=1 // pred_fallthru
      _
    // Predicated region
    $region34: #{tpu_custom_call.1} parent=1 // pred_check
      _
    $region35: #{tpu_custom_call.1} parent=1 // pred_check_branch
      %100 = sbr.rel (0) target = $region37
    $region36: #{tpu_custom_call.1} parent=1 // pred_region
      _
    $region37: #{tpu_custom_call.1} parent=1 // pred_fallthru
      _
    // Predicated region
    $region38: #{tpu_custom_call.1} parent=1 // pred_check
      _
    $region39: #{tpu_custom_call.1} parent=1 // pred_check_branch
      %102 = sbr.rel (0) target = $region41
    $region40: #{tpu_custom_call.1} parent=1 // pred_region
      %s104 = ssub.s32 8192, 8192
      %105 = vsyncadd [#allocation16], %s104
      %s106 = sshll.u32 [#allocation17], 4
      %s107 = int_to_ptr.vmem [resolvable:$true] %s106
      %112 = dma.hbm_to_vmem [thread:$0]  %s9, 8192, %s107, [#allocation16], 128, 128, 8
    $region41: #{tpu_custom_call.1} parent=1 // pred_fallthru
      _
    // Predicated region
    $region42: #{tpu_custom_call.1} parent=1 // pred_check
      _
    $region43: #{tpu_custom_call.1} parent=1 // pred_check_branch
      %114 = sbr.rel (0) target = $region45
    $region44: #{tpu_custom_call.1} parent=1 // pred_region
      _
    $region45: #{tpu_custom_call.1} parent=1 // pred_fallthru
      _
    // Predicated region
    $region46: #{tpu_custom_call.1} parent=1 // pred_check
      _
    $region47: #{tpu_custom_call.1} parent=1 // pred_check_branch
      %116 = sbr.rel (0) target = $region49
    $region48: #{tpu_custom_call.1} parent=1 // pred_region
      _
    $region49: #{tpu_custom_call.1} parent=1 // pred_fallthru
      _
    // Predicated region
    $region50: #{tpu_custom_call.1} parent=1 // pred_check
      _
    $region51: #{tpu_custom_call.1} parent=1 // pred_check_branch
      %118 = sbr.rel (0) target = $region53
    $region52: #{tpu_custom_call.1} parent=1 // pred_region
      _
    $region53: #{tpu_custom_call.1} parent=1 // pred_fallthru
      _
    // Predicated region
    $region54: #{tpu_custom_call.1} parent=1 // pred_check
      _
    $region55: #{tpu_custom_call.1} parent=1 // pred_check_branch
      %120 = sbr.rel (0) target = $region57
    $region56: #{tpu_custom_call.1} parent=1 // pred_region
      %121 = dma.done [#allocation7], 256
    $region57: #{tpu_custom_call.1} parent=1 // pred_fallthru
      _
    // Predicated region
    $region58: #{tpu_custom_call.1} parent=1 // pred_check
      _
    $region59: #{tpu_custom_call.1} parent=1 // pred_check_branch
      %123 = sbr.rel (0) target = $region61
    $region60: #{tpu_custom_call.1} parent=1 // pred_region
      %124 = dma.done [#allocation10], 256
    $region61: #{tpu_custom_call.1} parent=1 // pred_fallthru
      _
    // Predicated region
    $region62: #{tpu_custom_call.1} parent=1 // pred_check
      _
    $region63: #{tpu_custom_call.1} parent=1 // pred_check_branch
      %126 = sbr.rel (0) target = $region65
    $region64: #{tpu_custom_call.1} parent=1 // pred_region
      %127 = dma.done [#allocation10], 256
    $region65: #{tpu_custom_call.1} parent=1 // pred_fallthru
      _
    // Predicated region
    $region66: #{tpu_custom_call.1} parent=1 // pred_check
      _
    $region67: #{tpu_custom_call.1} parent=1 // pred_check_branch
      %129 = sbr.rel (0) target = $region69
    $region68: #{tpu_custom_call.1} parent=1 // pred_region
      %130 = dma.done [#allocation13], 8192
    $region69: #{tpu_custom_call.1} parent=1 // pred_fallthru
      _
    // Predicated region
    $region70: #{tpu_custom_call.1} parent=1 // pred_check
      _
    $region71: #{tpu_custom_call.1} parent=1 // pred_check_branch
      %132 = sbr.rel (0) target = $region73
    $region72: #{tpu_custom_call.1} parent=1 // pred_region
      %133 = dma.done [#allocation13], 8192
    $region73: #{tpu_custom_call.1} parent=1 // pred_fallthru
      _
    // Predicated region
    $region74: #{tpu_custom_call.1} parent=1 // pred_check
      _
    $region75: #{tpu_custom_call.1} parent=1 // pred_check_branch
      %135 = sbr.rel (0) target = $region77
    $region76: #{tpu_custom_call.1} parent=1 // pred_region
      %136 = dma.done [#allocation16], 8192
    $region77: #{tpu_custom_call.1} parent=1 // pred_fallthru
      _
    // Predicated region
    $region78: #{tpu_custom_call.1} parent=1 // pred_check
      _
    $region79: #{tpu_custom_call.1} parent=1 // pred_check_branch
      %138 = sbr.rel (0) target = $region81
    $region80: #{tpu_custom_call.1} parent=1 // pred_region
      %139 = dma.done [#allocation16], 8192
    $region81: #{tpu_custom_call.1} parent=1 // pred_fallthru
      _
    %v140 = vld [vmem:[#allocation6] sm:$0xff]
    %v141 = vld [vmem:[#allocation6 + $0x8] sm:$0xff]
    %v142 = vld [vmem:[#allocation12] sm:$0xff]
    %v143 = vld [vmem:[#allocation12 + $0x8] sm:$0xff]
    %v144 = vld [vmem:[#allocation12 + $0x10] sm:$0xff]
    %v145 = vld [vmem:[#allocation12 + $0x18] sm:$0xff]
    %v146 = vld [vmem:[#allocation12 + $0x20] sm:$0xff]
    %v147 = vld [vmem:[#allocation12 + $0x28] sm:$0xff]
    %v148 = vld [vmem:[#allocation12 + $0x30] sm:$0xff]
    %v149 = vld [vmem:[#allocation12 + $0x38] sm:$0xff]
    %v150 = vld [vmem:[#allocation12 + $0x40] sm:$0xff]
    %v151 = vld [vmem:[#allocation12 + $0x48] sm:$0xff]
    %v152 = vld [vmem:[#allocation12 + $0x50] sm:$0xff]
    %v153 = vld [vmem:[#allocation12 + $0x58] sm:$0xff]
    %v154 = vld [vmem:[#allocation12 + $0x60] sm:$0xff]
    %v155 = vld [vmem:[#allocation12 + $0x68] sm:$0xff]
    %v156 = vld [vmem:[#allocation12 + $0x70] sm:$0xff]
    %v157 = vld [vmem:[#allocation12 + $0x78] sm:$0xff]
    %v158 = vld [vmem:[#allocation12 + $0x80] sm:$0xff]
    %v159 = vld [vmem:[#allocation12 + $0x88] sm:$0xff]
    %v160 = vld [vmem:[#allocation12 + $0x90] sm:$0xff]
    %v161 = vld [vmem:[#allocation12 + $0x98] sm:$0xff]
    %v162 = vld [vmem:[#allocation12 + $0xa0] sm:$0xff]
    %v163 = vld [vmem:[#allocation12 + $0xa8] sm:$0xff]
    %v164 = vld [vmem:[#allocation12 + $0xb0] sm:$0xff]
    %v165 = vld [vmem:[#allocation12 + $0xb8] sm:$0xff]
    %v166 = vld [vmem:[#allocation12 + $0xc0] sm:$0xff]
    %v167 = vld [vmem:[#allocation12 + $0xc8] sm:$0xff]
    %v168 = vld [vmem:[#allocation12 + $0xd0] sm:$0xff]
    %v169 = vld [vmem:[#allocation12 + $0xd8] sm:$0xff]
    %v170 = vld [vmem:[#allocation12 + $0xe0] sm:$0xff]
    %v171 = vld [vmem:[#allocation12 + $0xe8] sm:$0xff]
    %v172 = vld [vmem:[#allocation12 + $0xf0] sm:$0xff]
    %v173 = vld [vmem:[#allocation12 + $0xf8] sm:$0xff]
    %v174 = vld [vmem:[#allocation12 + $0x100] sm:$0xff]
    %v175 = vld [vmem:[#allocation12 + $0x108] sm:$0xff]
    %v176 = vld [vmem:[#allocation12 + $0x110] sm:$0xff]
    %v177 = vld [vmem:[#allocation12 + $0x118] sm:$0xff]
    %v178 = vld [vmem:[#allocation12 + $0x120] sm:$0xff]
    %v179 = vld [vmem:[#allocation12 + $0x128] sm:$0xff]
    %v180 = vld [vmem:[#allocation12 + $0x130] sm:$0xff]
    %v181 = vld [vmem:[#allocation12 + $0x138] sm:$0xff]
    %v182 = vld [vmem:[#allocation12 + $0x140] sm:$0xff]
    %v183 = vld [vmem:[#allocation12 + $0x148] sm:$0xff]
    %v184 = vld [vmem:[#allocation12 + $0x150] sm:$0xff]
    %v185 = vld [vmem:[#allocation12 + $0x158] sm:$0xff]
    %v186 = vld [vmem:[#allocation12 + $0x160] sm:$0xff]
    %v187 = vld [vmem:[#allocation12 + $0x168] sm:$0xff]
    %v188 = vld [vmem:[#allocation12 + $0x170] sm:$0xff]
    %v189 = vld [vmem:[#allocation12 + $0x178] sm:$0xff]
    %v190 = vld [vmem:[#allocation12 + $0x180] sm:$0xff]
    %v191 = vld [vmem:[#allocation12 + $0x188] sm:$0xff]
    %v192 = vld [vmem:[#allocation12 + $0x190] sm:$0xff]
    %v193 = vld [vmem:[#allocation12 + $0x198] sm:$0xff]
    %v194 = vld [vmem:[#allocation12 + $0x1a0] sm:$0xff]
    %v195 = vld [vmem:[#allocation12 + $0x1a8] sm:$0xff]
    %v196 = vld [vmem:[#allocation12 + $0x1b0] sm:$0xff]
    %v197 = vld [vmem:[#allocation12 + $0x1b8] sm:$0xff]
    %v198 = vld [vmem:[#allocation12 + $0x1c0] sm:$0xff]
    %v199 = vld [vmem:[#allocation12 + $0x1c8] sm:$0xff]
    %v200 = vld [vmem:[#allocation12 + $0x1d0] sm:$0xff]
    %v201 = vld [vmem:[#allocation12 + $0x1d8] sm:$0xff]
    %v202 = vld [vmem:[#allocation12 + $0x1e0] sm:$0xff]
    %v203 = vld [vmem:[#allocation12 + $0x1e8] sm:$0xff]
    %v204 = vld [vmem:[#allocation12 + $0x1f0] sm:$0xff]
    %v205 = vld [vmem:[#allocation12 + $0x1f8] sm:$0xff]
    %v206 = vld [vmem:[%s4] sm:$0xf]
    %v208 = vlaneseq
    %v209 = vshrl.u32 %v208, 7
    %v210 = vsub.s32 0, %v209
    %v211 = vrot.slane %v206, %v210
    %v212 = vlaneseq
    %v213 = vshrl.u32 %v212, 7
    %v214 = vsub.s32 1, %v213
    %v215 = vrot.slane %v206, %v214
    %v216 = vlaneseq
    %v217 = vshrl.u32 %v216, 7
    %v218 = vsub.s32 2, %v217
    %v219 = vrot.slane %v206, %v218
    %v220 = vlaneseq
    %v221 = vshrl.u32 %v220, 7
    %v222 = vsub.s32 3, %v221
    %v223 = vrot.slane %v206, %v222
    %228 = vmatprep.subr.mxu0 %v143
    %229 = vmatpush1.msra.mxu0 %v142
    %230 = vmatprep.subr.mxu0 %v147
    %231 = vmatpush1.msra.mxu0 %v146
    %232 = vmatprep.subr.mxu0 %v151
    %233 = vmatpush1.msra.mxu0 %v150
    %234 = vmatprep.subr.mxu0 %v155
    %235 = vmatpush1.msra.mxu0 %v154
    %236 = vmatprep.subr.mxu0 %v159
    %237 = vmatpush1.msra.mxu0 %v158
    %238 = vmatprep.subr.mxu0 %v163
    %239 = vmatpush1.msra.mxu0 %v162
    %240 = vmatprep.subr.mxu0 %v167
    %241 = vmatpush1.msra.mxu0 %v166
    %242 = vmatprep.subr.mxu0 %v171
    %243 = vmatpush1.msra.mxu0 %v170
    %244 = vmatprep.subr.mxu0 %v175
    %245 = vmatpush1.msra.mxu0 %v174
    %246 = vmatprep.subr.mxu0 %v179
    %247 = vmatpush1.msra.mxu0 %v178
    %248 = vmatprep.subr.mxu0 %v183
    %249 = vmatpush1.msra.mxu0 %v182
    %250 = vmatprep.subr.mxu0 %v187
    %251 = vmatpush1.msra.mxu0 %v186
    %252 = vmatprep.subr.mxu0 %v191
    %253 = vmatpush1.msra.mxu0 %v190
    %254 = vmatprep.subr.mxu0 %v195
    %255 = vmatpush1.msra.mxu0 %v194
    %256 = vmatprep.subr.mxu0 %v199
    %257 = vmatpush1.msra.mxu0 %v198
    %258 = vmatprep.subr.mxu0 %v203
    %259 = vmatpush1.msra.mxu0 %v202
    %260 = vmatprep.subr.mxu0 0.0
    %261 = vmatpush1.msra.mxu0 0.0
    %262 = vmatprep.subr.mxu0 0.0
    %263 = vmatpush1.msra.mxu0 0.0
    %264 = vmatprep.subr.mxu0 0.0
    %265 = vmatpush1.msra.mxu0 0.0
    %266 = vmatprep.subr.mxu0 0.0
    %267 = vmatpush1.msra.mxu0 0.0
    %268 = vmatprep.subr.mxu0 0.0
    %269 = vmatpush1.msra.mxu0 0.0
    %270 = vmatprep.subr.mxu0 0.0
    %271 = vmatpush1.msra.mxu0 0.0
    %272 = vmatprep.subr.mxu0 0.0
    %273 = vmatpush1.msra.mxu0 0.0
    %274 = vmatprep.subr.mxu0 0.0
    %275 = vmatpush1.msra.mxu0 0.0
    %276 = vmatprep.subr.mxu0 0.0
    %277 = vmatpush1.msra.mxu0 0.0
    %278 = vmatprep.subr.mxu0 0.0
    %279 = vmatpush1.msra.mxu0 0.0
    %280 = vmatprep.subr.mxu0 0.0
    %281 = vmatpush1.msra.mxu0 0.0
    %282 = vmatprep.subr.mxu0 0.0
    %283 = vmatpush1.msra.mxu0 0.0
    %284 = vmatprep.subr.mxu0 0.0
    %285 = vmatpush1.msra.mxu0 0.0
    %286 = vmatprep.subr.mxu0 0.0
    %287 = vmatpush1.msra.mxu0 0.0
    %288 = vmatprep.subr.mxu0 0.0
    %289 = vmatpush1.msra.mxu0 0.0
    %290 = vmatprep.subr.mxu0 0.0
    %291 = vmatpush1.msra.mxu0 0.0
    %292 = vmatprep.mubr.f32.mxu0 0.0
    %293 = vmatmul.mubr.f32.gmra.mrb[0].mxu0 %v140
    %v294 = vpop.f32.mrb[0].mxu0
    %v295 = vadd.f32 %v211, %v294
    %v296 = vpop.f32.mrb[0].mxu0
    %v297 = vadd.f32 %v215, %v296
    %298 = vmatprep.mubr.f32.mxu0 0.0
    %299 = vmatmul.mubr.f32.gmra.mrb[0].mxu0 %v141
    %v300 = vpop.f32.mrb[0].mxu0
    %v301 = vadd.f32 %v211, %v300
    %v302 = vpop.f32.mrb[0].mxu0
    %v303 = vadd.f32 %v215, %v302
    %304 = vdwg.mxu0
    %305 = vmatprep.subr.mxu0 %v145
    %306 = vmatpush1.msra.mxu0 %v144
    %307 = vmatprep.subr.mxu0 %v149
    %308 = vmatpush1.msra.mxu0 %v148
    %309 = vmatprep.subr.mxu0 %v153
    %310 = vmatpush1.msra.mxu0 %v152
    %311 = vmatprep.subr.mxu0 %v157
    %312 = vmatpush1.msra.mxu0 %v156
    %313 = vmatprep.subr.mxu0 %v161
    %314 = vmatpush1.msra.mxu0 %v160
    %315 = vmatprep.subr.mxu0 %v165
    %316 = vmatpush1.msra.mxu0 %v164
    %317 = vmatprep.subr.mxu0 %v169
    %318 = vmatpush1.msra.mxu0 %v168
    %319 = vmatprep.subr.mxu0 %v173
    %320 = vmatpush1.msra.mxu0 %v172
    %321 = vmatprep.subr.mxu0 %v177
    %322 = vmatpush1.msra.mxu0 %v176
    %323 = vmatprep.subr.mxu0 %v181
    %324 = vmatpush1.msra.mxu0 %v180
    %325 = vmatprep.subr.mxu0 %v185
    %326 = vmatpush1.msra.mxu0 %v184
    %327 = vmatprep.subr.mxu0 %v189
    %328 = vmatpush1.msra.mxu0 %v188
    %329 = vmatprep.subr.mxu0 %v193
    %330 = vmatpush1.msra.mxu0 %v192
    %331 = vmatprep.subr.mxu0 %v197
    %332 = vmatpush1.msra.mxu0 %v196
    %333 = vmatprep.subr.mxu0 %v201
    %334 = vmatpush1.msra.mxu0 %v200
    %335 = vmatprep.subr.mxu0 %v205
    %336 = vmatpush1.msra.mxu0 %v204
    %337 = vmatprep.subr.mxu0 0.0
    %338 = vmatpush1.msra.mxu0 0.0
    %339 = vmatprep.subr.mxu0 0.0
    %340 = vmatpush1.msra.mxu0 0.0
    %341 = vmatprep.subr.mxu0 0.0
    %342 = vmatpush1.msra.mxu0 0.0
    %343 = vmatprep.subr.mxu0 0.0
    %344 = vmatpush1.msra.mxu0 0.0
    %345 = vmatprep.subr.mxu0 0.0
    %346 = vmatpush1.msra.mxu0 0.0
    %347 = vmatprep.subr.mxu0 0.0
    %348 = vmatpush1.msra.mxu0 0.0
    %349 = vmatprep.subr.mxu0 0.0
    %350 = vmatpush1.msra.mxu0 0.0
    %351 = vmatprep.subr.mxu0 0.0
    %352 = vmatpush1.msra.mxu0 0.0
    %353 = vmatprep.subr.mxu0 0.0
    %354 = vmatpush1.msra.mxu0 0.0
    %355 = vmatprep.subr.mxu0 0.0
    %356 = vmatpush1.msra.mxu0 0.0
    %357 = vmatprep.subr.mxu0 0.0
    %358 = vmatpush1.msra.mxu0 0.0
    %359 = vmatprep.subr.mxu0 0.0
    %360 = vmatpush1.msra.mxu0 0.0
    %361 = vmatprep.subr.mxu0 0.0
    %362 = vmatpush1.msra.mxu0 0.0
    %363 = vmatprep.subr.mxu0 0.0
    %364 = vmatpush1.msra.mxu0 0.0
    %365 = vmatprep.subr.mxu0 0.0
    %366 = vmatpush1.msra.mxu0 0.0
    %367 = vmatprep.subr.mxu0 0.0
    %368 = vmatpush1.msra.mxu0 0.0
    %369 = vmatprep.mubr.f32.mxu0 0.0
    %370 = vmatmul.mubr.f32.gmra.mrb[0].mxu0 %v140
    %v371 = vpop.f32.mrb[0].mxu0
    %v372 = vadd.f32 %v219, %v371
    %v373 = vpop.f32.mrb[0].mxu0
    %v374 = vadd.f32 %v223, %v373
    %375 = vmatprep.mubr.f32.mxu0 0.0
    %376 = vmatmul.mubr.f32.gmra.mrb[0].mxu0 %v141
    %v377 = vpop.f32.mrb[0].mxu0
    %v378 = vadd.f32 %v219, %v377
    %v379 = vpop.f32.mrb[0].mxu0
    %v380 = vadd.f32 %v223, %v379
    %381 = vdwg.mxu0
    %v382 = vmul.f32 %v295, 0.088388346
    %v383 = vmul.f32 %v297, 0.088388346
    %v384 = vmul.f32 %v372, 0.088388346
    %v385 = vmul.f32 %v374, 0.088388346
    %v386 = vmul.f32 %v301, 0.088388346
    %v387 = vmul.f32 %v303, 0.088388346
    %v388 = vmul.f32 %v378, 0.088388346
    %v389 = vmul.f32 %v380, 0.088388346
    %v390 = vld [vmem:[#allocation9] sm:$0xff]
    %v391 = vld [vmem:[#allocation9 + $0x8] sm:$0xff]
    %v392 = vld [vmem:[#allocation14] sm:$0xff]
    %v393 = vld [vmem:[#allocation14 + $0x8] sm:$0xff]
    %v394 = vld [vmem:[#allocation14 + $0x10] sm:$0xff]
    %v395 = vld [vmem:[#allocation14 + $0x18] sm:$0xff]
    %v396 = vld [vmem:[#allocation14 + $0x20] sm:$0xff]
    %v397 = vld [vmem:[#allocation14 + $0x28] sm:$0xff]
    %v398 = vld [vmem:[#allocation14 + $0x30] sm:$0xff]
    %v399 = vld [vmem:[#allocation14 + $0x38] sm:$0xff]
    %v400 = vld [vmem:[#allocation14 + $0x40] sm:$0xff]
    %v401 = vld [vmem:[#allocation14 + $0x48] sm:$0xff]
    %v402 = vld [vmem:[#allocation14 + $0x50] sm:$0xff]
    %v403 = vld [vmem:[#allocation14 + $0x58] sm:$0xff]
    %v404 = vld [vmem:[#allocation14 + $0x60] sm:$0xff]
    %v405 = vld [vmem:[#allocation14 + $0x68] sm:$0xff]
    %v406 = vld [vmem:[#allocation14 + $0x70] sm:$0xff]
    %v407 = vld [vmem:[#allocation14 + $0x78] sm:$0xff]
    %v408 = vld [vmem:[#allocation14 + $0x80] sm:$0xff]
    %v409 = vld [vmem:[#allocation14 + $0x88] sm:$0xff]
    %v410 = vld [vmem:[#allocation14 + $0x90] sm:$0xff]
    %v411 = vld [vmem:[#allocation14 + $0x98] sm:$0xff]
    %v412 = vld [vmem:[#allocation14 + $0xa0] sm:$0xff]
    %v413 = vld [vmem:[#allocation14 + $0xa8] sm:$0xff]
    %v414 = vld [vmem:[#allocation14 + $0xb0] sm:$0xff]
    %v415 = vld [vmem:[#allocation14 + $0xb8] sm:$0xff]
    %v416 = vld [vmem:[#allocation14 + $0xc0] sm:$0xff]
    %v417 = vld [vmem:[#allocation14 + $0xc8] sm:$0xff]
    %v418 = vld [vmem:[#allocation14 + $0xd0] sm:$0xff]
    %v419 = vld [vmem:[#allocation14 + $0xd8] sm:$0xff]
    %v420 = vld [vmem:[#allocation14 + $0xe0] sm:$0xff]
    %v421 = vld [vmem:[#allocation14 + $0xe8] sm:$0xff]
    %v422 = vld [vmem:[#allocation14 + $0xf0] sm:$0xff]
    %v423 = vld [vmem:[#allocation14 + $0xf8] sm:$0xff]
    %v424 = vld [vmem:[#allocation14 + $0x100] sm:$0xff]
    %v425 = vld [vmem:[#allocation14 + $0x108] sm:$0xff]
    %v426 = vld [vmem:[#allocation14 + $0x110] sm:$0xff]
    %v427 = vld [vmem:[#allocation14 + $0x118] sm:$0xff]
    %v428 = vld [vmem:[#allocation14 + $0x120] sm:$0xff]
    %v429 = vld [vmem:[#allocation14 + $0x128] sm:$0xff]
    %v430 = vld [vmem:[#allocation14 + $0x130] sm:$0xff]
    %v431 = vld [vmem:[#allocation14 + $0x138] sm:$0xff]
    %v432 = vld [vmem:[#allocation14 + $0x140] sm:$0xff]
    %v433 = vld [vmem:[#allocation14 + $0x148] sm:$0xff]
    %v434 = vld [vmem:[#allocation14 + $0x150] sm:$0xff]
    %v435 = vld [vmem:[#allocation14 + $0x158] sm:$0xff]
    %v436 = vld [vmem:[#allocation14 + $0x160] sm:$0xff]
    %v437 = vld [vmem:[#allocation14 + $0x168] sm:$0xff]
    %v438 = vld [vmem:[#allocation14 + $0x170] sm:$0xff]
    %v439 = vld [vmem:[#allocation14 + $0x178] sm:$0xff]
    %v440 = vld [vmem:[#allocation14 + $0x180] sm:$0xff]
    %v441 = vld [vmem:[#allocation14 + $0x188] sm:$0xff]
    %v442 = vld [vmem:[#allocation14 + $0x190] sm:$0xff]
    %v443 = vld [vmem:[#allocation14 + $0x198] sm:$0xff]
    %v444 = vld [vmem:[#allocation14 + $0x1a0] sm:$0xff]
    %v445 = vld [vmem:[#allocation14 + $0x1a8] sm:$0xff]
    %v446 = vld [vmem:[#allocation14 + $0x1b0] sm:$0xff]
    %v447 = vld [vmem:[#allocation14 + $0x1b8] sm:$0xff]
    %v448 = vld [vmem:[#allocation14 + $0x1c0] sm:$0xff]
    %v449 = vld [vmem:[#allocation14 + $0x1c8] sm:$0xff]
    %v450 = vld [vmem:[#allocation14 + $0x1d0] sm:$0xff]
    %v451 = vld [vmem:[#allocation14 + $0x1d8] sm:$0xff]
    %v452 = vld [vmem:[#allocation14 + $0x1e0] sm:$0xff]
    %v453 = vld [vmem:[#allocation14 + $0x1e8] sm:$0xff]
    %v454 = vld [vmem:[#allocation14 + $0x1f0] sm:$0xff]
    %v455 = vld [vmem:[#allocation14 + $0x1f8] sm:$0xff]
    %v456 = vld [vmem:[%s6] sm:$0xf]
    %v458 = vlaneseq
    %v459 = vshrl.u32 %v458, 7
    %v460 = vsub.s32 0, %v459
    %v461 = vrot.slane %v456, %v460
    %v462 = vlaneseq
    %v463 = vshrl.u32 %v462, 7
    %v464 = vsub.s32 1, %v463
    %v465 = vrot.slane %v456, %v464
    %v466 = vlaneseq
    %v467 = vshrl.u32 %v466, 7
    %v468 = vsub.s32 2, %v467
    %v469 = vrot.slane %v456, %v468
    %v470 = vlaneseq
    %v471 = vshrl.u32 %v470, 7
    %v472 = vsub.s32 3, %v471
    %v473 = vrot.slane %v456, %v472
    %478 = vmatprep.subr.mxu0 %v393
    %479 = vmatpush1.msra.mxu0 %v392
    %480 = vmatprep.subr.mxu0 %v397
    %481 = vmatpush1.msra.mxu0 %v396
    %482 = vmatprep.subr.mxu0 %v401
    %483 = vmatpush1.msra.mxu0 %v400
    %484 = vmatprep.subr.mxu0 %v405
    %485 = vmatpush1.msra.mxu0 %v404
    %486 = vmatprep.subr.mxu0 %v409
    %487 = vmatpush1.msra.mxu0 %v408
    %488 = vmatprep.subr.mxu0 %v413
    %489 = vmatpush1.msra.mxu0 %v412
    %490 = vmatprep.subr.mxu0 %v417
    %491 = vmatpush1.msra.mxu0 %v416
    %492 = vmatprep.subr.mxu0 %v421
    %493 = vmatpush1.msra.mxu0 %v420
    %494 = vmatprep.subr.mxu0 %v425
    %495 = vmatpush1.msra.mxu0 %v424
    %496 = vmatprep.subr.mxu0 %v429
    %497 = vmatpush1.msra.mxu0 %v428
    %498 = vmatprep.subr.mxu0 %v433
    %499 = vmatpush1.msra.mxu0 %v432
    %500 = vmatprep.subr.mxu0 %v437
    %501 = vmatpush1.msra.mxu0 %v436
    %502 = vmatprep.subr.mxu0 %v441
    %503 = vmatpush1.msra.mxu0 %v440
    %504 = vmatprep.subr.mxu0 %v445
    %505 = vmatpush1.msra.mxu0 %v444
    %506 = vmatprep.subr.mxu0 %v449
    %507 = vmatpush1.msra.mxu0 %v448
    %508 = vmatprep.subr.mxu0 %v453
    %509 = vmatpush1.msra.mxu0 %v452
    %510 = vmatprep.subr.mxu0 0.0
    %511 = vmatpush1.msra.mxu0 0.0
    %512 = vmatprep.subr.mxu0 0.0
    %513 = vmatpush1.msra.mxu0 0.0
    %514 = vmatprep.subr.mxu0 0.0
    %515 = vmatpush1.msra.mxu0 0.0
    %516 = vmatprep.subr.mxu0 0.0
    %517 = vmatpush1.msra.mxu0 0.0
    %518 = vmatprep.subr.mxu0 0.0
    %519 = vmatpush1.msra.mxu0 0.0
    %520 = vmatprep.subr.mxu0 0.0
    %521 = vmatpush1.msra.mxu0 0.0
    %522 = vmatprep.subr.mxu0 0.0
    %523 = vmatpush1.msra.mxu0 0.0
    %524 = vmatprep.subr.mxu0 0.0
    %525 = vmatpush1.msra.mxu0 0.0
    %526 = vmatprep.subr.mxu0 0.0
    %527 = vmatpush1.msra.mxu0 0.0
    %528 = vmatprep.subr.mxu0 0.0
    %529 = vmatpush1.msra.mxu0 0.0
    %530 = vmatprep.subr.mxu0 0.0
    %531 = vmatpush1.msra.mxu0 0.0
    %532 = vmatprep.subr.mxu0 0.0
    %533 = vmatpush1.msra.mxu0 0.0
    %534 = vmatprep.subr.mxu0 0.0
    %535 = vmatpush1.msra.mxu0 0.0
    %536 = vmatprep.subr.mxu0 0.0
    %537 = vmatpush1.msra.mxu0 0.0
    %538 = vmatprep.subr.mxu0 0.0
    %539 = vmatpush1.msra.mxu0 0.0
    %540 = vmatprep.subr.mxu0 0.0
    %541 = vmatpush1.msra.mxu0 0.0
    %542 = vmatprep.mubr.f32.mxu0 0.0
    %543 = vmatmul.mubr.f32.gmra.mrb[0].mxu0 %v390
    %v544 = vpop.f32.mrb[0].mxu0
    %v545 = vadd.f32 %v461, %v544
    %v546 = vpop.f32.mrb[0].mxu0
    %v547 = vadd.f32 %v465, %v546
    %548 = vmatprep.mubr.f32.mxu0 0.0
    %549 = vmatmul.mubr.f32.gmra.mrb[0].mxu0 %v391
    %v550 = vpop.f32.mrb[0].mxu0
    %v551 = vadd.f32 %v461, %v550
    %v552 = vpop.f32.mrb[0].mxu0
    %v553 = vadd.f32 %v465, %v552
    %554 = vdwg.mxu0
    %555 = vmatprep.subr.mxu0 %v395
    %556 = vmatpush1.msra.mxu0 %v394
    %557 = vmatprep.subr.mxu0 %v399
    %558 = vmatpush1.msra.mxu0 %v398
    %559 = vmatprep.subr.mxu0 %v403
    %560 = vmatpush1.msra.mxu0 %v402
    %561 = vmatprep.subr.mxu0 %v407
    %562 = vmatpush1.msra.mxu0 %v406
    %563 = vmatprep.subr.mxu0 %v411
    %564 = vmatpush1.msra.mxu0 %v410
    %565 = vmatprep.subr.mxu0 %v415
    %566 = vmatpush1.msra.mxu0 %v414
    %567 = vmatprep.subr.mxu0 %v419
    %568 = vmatpush1.msra.mxu0 %v418
    %569 = vmatprep.subr.mxu0 %v423
    %570 = vmatpush1.msra.mxu0 %v422
    %571 = vmatprep.subr.mxu0 %v427
    %572 = vmatpush1.msra.mxu0 %v426
    %573 = vmatprep.subr.mxu0 %v431
    %574 = vmatpush1.msra.mxu0 %v430
    %575 = vmatprep.subr.mxu0 %v435
    %576 = vmatpush1.msra.mxu0 %v434
    %577 = vmatprep.subr.mxu0 %v439
    %578 = vmatpush1.msra.mxu0 %v438
    %579 = vmatprep.subr.mxu0 %v443
    %580 = vmatpush1.msra.mxu0 %v442
    %581 = vmatprep.subr.mxu0 %v447
    %582 = vmatpush1.msra.mxu0 %v446
    %583 = vmatprep.subr.mxu0 %v451
    %584 = vmatpush1.msra.mxu0 %v450
    %585 = vmatprep.subr.mxu0 %v455
    %586 = vmatpush1.msra.mxu0 %v454
    %587 = vmatprep.subr.mxu0 0.0
    %588 = vmatpush1.msra.mxu0 0.0
    %589 = vmatprep.subr.mxu0 0.0
    %590 = vmatpush1.msra.mxu0 0.0
    %591 = vmatprep.subr.mxu0 0.0
    %592 = vmatpush1.msra.mxu0 0.0
    %593 = vmatprep.subr.mxu0 0.0
    %594 = vmatpush1.msra.mxu0 0.0
    %595 = vmatprep.subr.mxu0 0.0
    %596 = vmatpush1.msra.mxu0 0.0
    %597 = vmatprep.subr.mxu0 0.0
    %598 = vmatpush1.msra.mxu0 0.0
    %599 = vmatprep.subr.mxu0 0.0
    %600 = vmatpush1.msra.mxu0 0.0
    %601 = vmatprep.subr.mxu0 0.0
    %602 = vmatpush1.msra.mxu0 0.0
    %603 = vmatprep.subr.mxu0 0.0
    %604 = vmatpush1.msra.mxu0 0.0
    %605 = vmatprep.subr.mxu0 0.0
    %606 = vmatpush1.msra.mxu0 0.0
    %607 = vmatprep.subr.mxu0 0.0
    %608 = vmatpush1.msra.mxu0 0.0
    %609 = vmatprep.subr.mxu0 0.0
    %610 = vmatpush1.msra.mxu0 0.0
    %611 = vmatprep.subr.mxu0 0.0
    %612 = vmatpush1.msra.mxu0 0.0
    %613 = vmatprep.subr.mxu0 0.0
    %614 = vmatpush1.msra.mxu0 0.0
    %615 = vmatprep.subr.mxu0 0.0
    %616 = vmatpush1.msra.mxu0 0.0
    %617 = vmatprep.subr.mxu0 0.0
    %618 = vmatpush1.msra.mxu0 0.0
    %619 = vmatprep.mubr.f32.mxu0 0.0
    %620 = vmatmul.mubr.f32.gmra.mrb[0].mxu0 %v390
    %v621 = vpop.f32.mrb[0].mxu0
    %v622 = vadd.f32 %v469, %v621
    %v623 = vpop.f32.mrb[0].mxu0
    %v624 = vadd.f32 %v473, %v623
    %625 = vmatprep.mubr.f32.mxu0 0.0
    %626 = vmatmul.mubr.f32.gmra.mrb[0].mxu0 %v391
    %v627 = vpop.f32.mrb[0].mxu0
    %v628 = vadd.f32 %v469, %v627
    %v629 = vpop.f32.mrb[0].mxu0
    %v630 = vadd.f32 %v473, %v629
    %631 = vdwg.mxu0
    %v632 = vld [vmem:[#allocation11] sm:$0xff]
    %v633 = vld [vmem:[#allocation11 + $0x8] sm:$0xff]
    %v634 = vld [vmem:[#allocation15] sm:$0xff]
    %v635 = vld [vmem:[#allocation15 + $0x8] sm:$0xff]
    %v636 = vld [vmem:[#allocation15 + $0x10] sm:$0xff]
    %v637 = vld [vmem:[#allocation15 + $0x18] sm:$0xff]
    %v638 = vld [vmem:[#allocation15 + $0x20] sm:$0xff]
    %v639 = vld [vmem:[#allocation15 + $0x28] sm:$0xff]
    %v640 = vld [vmem:[#allocation15 + $0x30] sm:$0xff]
    %v641 = vld [vmem:[#allocation15 + $0x38] sm:$0xff]
    %v642 = vld [vmem:[#allocation15 + $0x40] sm:$0xff]
    %v643 = vld [vmem:[#allocation15 + $0x48] sm:$0xff]
    %v644 = vld [vmem:[#allocation15 + $0x50] sm:$0xff]
    %v645 = vld [vmem:[#allocation15 + $0x58] sm:$0xff]
    %v646 = vld [vmem:[#allocation15 + $0x60] sm:$0xff]
    %v647 = vld [vmem:[#allocation15 + $0x68] sm:$0xff]
    %v648 = vld [vmem:[#allocation15 + $0x70] sm:$0xff]
    %v649 = vld [vmem:[#allocation15 + $0x78] sm:$0xff]
    %v650 = vld [vmem:[#allocation15 + $0x80] sm:$0xff]
    %v651 = vld [vmem:[#allocation15 + $0x88] sm:$0xff]
    %v652 = vld [vmem:[#allocation15 + $0x90] sm:$0xff]
    %v653 = vld [vmem:[#allocation15 + $0x98] sm:$0xff]
    %v654 = vld [vmem:[#allocation15 + $0xa0] sm:$0xff]
    %v655 = vld [vmem:[#allocation15 + $0xa8] sm:$0xff]
    %v656 = vld [vmem:[#allocation15 + $0xb0] sm:$0xff]
    %v657 = vld [vmem:[#allocation15 + $0xb8] sm:$0xff]
    %v658 = vld [vmem:[#allocation15 + $0xc0] sm:$0xff]
    %v659 = vld [vmem:[#allocation15 + $0xc8] sm:$0xff]
    %v660 = vld [vmem:[#allocation15 + $0xd0] sm:$0xff]
    %v661 = vld [vmem:[#allocation15 + $0xd8] sm:$0xff]
    %v662 = vld [vmem:[#allocation15 + $0xe0] sm:$0xff]
    %v663 = vld [vmem:[#allocation15 + $0xe8] sm:$0xff]
    %v664 = vld [vmem:[#allocation15 + $0xf0] sm:$0xff]
    %v665 = vld [vmem:[#allocation15 + $0xf8] sm:$0xff]
    %v666 = vld [vmem:[#allocation15 + $0x100] sm:$0xff]
    %v667 = vld [vmem:[#allocation15 + $0x108] sm:$0xff]
    %v668 = vld [vmem:[#allocation15 + $0x110] sm:$0xff]
    %v669 = vld [vmem:[#allocation15 + $0x118] sm:$0xff]
    %v670 = vld [vmem:[#allocation15 + $0x120] sm:$0xff]
    %v671 = vld [vmem:[#allocation15 + $0x128] sm:$0xff]
    %v672 = vld [vmem:[#allocation15 + $0x130] sm:$0xff]
    %v673 = vld [vmem:[#allocation15 + $0x138] sm:$0xff]
    %v674 = vld [vmem:[#allocation15 + $0x140] sm:$0xff]
    %v675 = vld [vmem:[#allocation15 + $0x148] sm:$0xff]
    %v676 = vld [vmem:[#allocation15 + $0x150] sm:$0xff]
    %v677 = vld [vmem:[#allocation15 + $0x158] sm:$0xff]
    %v678 = vld [vmem:[#allocation15 + $0x160] sm:$0xff]
    %v679 = vld [vmem:[#allocation15 + $0x168] sm:$0xff]
    %v680 = vld [vmem:[#allocation15 + $0x170] sm:$0xff]
    %v681 = vld [vmem:[#allocation15 + $0x178] sm:$0xff]
    %v682 = vld [vmem:[#allocation15 + $0x180] sm:$0xff]
    %v683 = vld [vmem:[#allocation15 + $0x188] sm:$0xff]
    %v684 = vld [vmem:[#allocation15 + $0x190] sm:$0xff]
    %v685 = vld [vmem:[#allocation15 + $0x198] sm:$0xff]
    %v686 = vld [vmem:[#allocation15 + $0x1a0] sm:$0xff]
    %v687 = vld [vmem:[#allocation15 + $0x1a8] sm:$0xff]
    %v688 = vld [vmem:[#allocation15 + $0x1b0] sm:$0xff]
    %v689 = vld [vmem:[#allocation15 + $0x1b8] sm:$0xff]
    %v690 = vld [vmem:[#allocation15 + $0x1c0] sm:$0xff]
    %v691 = vld [vmem:[#allocation15 + $0x1c8] sm:$0xff]
    %v692 = vld [vmem:[#allocation15 + $0x1d0] sm:$0xff]
    %v693 = vld [vmem:[#allocation15 + $0x1d8] sm:$0xff]
    %v694 = vld [vmem:[#allocation15 + $0x1e0] sm:$0xff]
    %v695 = vld [vmem:[#allocation15 + $0x1e8] sm:$0xff]
    %v696 = vld [vmem:[#allocation15 + $0x1f0] sm:$0xff]
    %v697 = vld [vmem:[#allocation15 + $0x1f8] sm:$0xff]
    %v698 = vld [vmem:[%s8] sm:$0xf]
    %v700 = vlaneseq
    %v701 = vshrl.u32 %v700, 7
    %v702 = vsub.s32 0, %v701
    %v703 = vrot.slane %v698, %v702
    %v704 = vlaneseq
    %v705 = vshrl.u32 %v704, 7
    %v706 = vsub.s32 1, %v705
    %v707 = vrot.slane %v698, %v706
    %v708 = vlaneseq
    %v709 = vshrl.u32 %v708, 7
    %v710 = vsub.s32 2, %v709
    %v711 = vrot.slane %v698, %v710
    %v712 = vlaneseq
    %v713 = vshrl.u32 %v712, 7
    %v714 = vsub.s32 3, %v713
    %v715 = vrot.slane %v698, %v714
    %720 = vmatprep.subr.mxu0 %v635
    %721 = vmatpush1.msra.mxu0 %v634
    %722 = vmatprep.subr.mxu0 %v639
    %723 = vmatpush1.msra.mxu0 %v638
    %724 = vmatprep.subr.mxu0 %v643
    %725 = vmatpush1.msra.mxu0 %v642
    %726 = vmatprep.subr.mxu0 %v647
    %727 = vmatpush1.msra.mxu0 %v646
    %728 = vmatprep.subr.mxu0 %v651
    %729 = vmatpush1.msra.mxu0 %v650
    %730 = vmatprep.subr.mxu0 %v655
    %731 = vmatpush1.msra.mxu0 %v654
    %732 = vmatprep.subr.mxu0 %v659
    %733 = vmatpush1.msra.mxu0 %v658
    %734 = vmatprep.subr.mxu0 %v663
    %735 = vmatpush1.msra.mxu0 %v662
    %736 = vmatprep.subr.mxu0 %v667
    %737 = vmatpush1.msra.mxu0 %v666
    %738 = vmatprep.subr.mxu0 %v671
    %739 = vmatpush1.msra.mxu0 %v670
    %740 = vmatprep.subr.mxu0 %v675
    %741 = vmatpush1.msra.mxu0 %v674
    %742 = vmatprep.subr.mxu0 %v679
    %743 = vmatpush1.msra.mxu0 %v678
    %744 = vmatprep.subr.mxu0 %v683
    %745 = vmatpush1.msra.mxu0 %v682
    %746 = vmatprep.subr.mxu0 %v687
    %747 = vmatpush1.msra.mxu0 %v686
    %748 = vmatprep.subr.mxu0 %v691
    %749 = vmatpush1.msra.mxu0 %v690
    %750 = vmatprep.subr.mxu0 %v695
    %751 = vmatpush1.msra.mxu0 %v694
    %752 = vmatprep.subr.mxu0 0.0
    %753 = vmatpush1.msra.mxu0 0.0
    %754 = vmatprep.subr.mxu0 0.0
    %755 = vmatpush1.msra.mxu0 0.0
    %756 = vmatprep.subr.mxu0 0.0
    %757 = vmatpush1.msra.mxu0 0.0
    %758 = vmatprep.subr.mxu0 0.0
    %759 = vmatpush1.msra.mxu0 0.0
    %760 = vmatprep.subr.mxu0 0.0
    %761 = vmatpush1.msra.mxu0 0.0
    %762 = vmatprep.subr.mxu0 0.0
    %763 = vmatpush1.msra.mxu0 0.0
    %764 = vmatprep.subr.mxu0 0.0
    %765 = vmatpush1.msra.mxu0 0.0
    %766 = vmatprep.subr.mxu0 0.0
    %767 = vmatpush1.msra.mxu0 0.0
    %768 = vmatprep.subr.mxu0 0.0
    %769 = vmatpush1.msra.mxu0 0.0
    %770 = vmatprep.subr.mxu0 0.0
    %771 = vmatpush1.msra.mxu0 0.0
    %772 = vmatprep.subr.mxu0 0.0
    %773 = vmatpush1.msra.mxu0 0.0
    %774 = vmatprep.subr.mxu0 0.0
    %775 = vmatpush1.msra.mxu0 0.0
    %776 = vmatprep.subr.mxu0 0.0
    %777 = vmatpush1.msra.mxu0 0.0
    %778 = vmatprep.subr.mxu0 0.0
    %779 = vmatpush1.msra.mxu0 0.0
    %780 = vmatprep.subr.mxu0 0.0
    %781 = vmatpush1.msra.mxu0 0.0
    %782 = vmatprep.subr.mxu0 0.0
    %783 = vmatpush1.msra.mxu0 0.0
    %784 = vmatprep.mubr.f32.mxu0 0.0
    %785 = vmatmul.mubr.f32.gmra.mrb[0].mxu0 %v632
    %v786 = vpop.f32.mrb[0].mxu0
    %v787 = vadd.f32 %v703, %v786
    %v788 = vpop.f32.mrb[0].mxu0
    %v789 = vadd.f32 %v707, %v788
    %790 = vmatprep.mubr.f32.mxu0 0.0
    %791 = vmatmul.mubr.f32.gmra.mrb[0].mxu0 %v633
    %v792 = vpop.f32.mrb[0].mxu0
    %v793 = vadd.f32 %v703, %v792
    %v794 = vpop.f32.mrb[0].mxu0
    %v795 = vadd.f32 %v707, %v794
    %796 = vdwg.mxu0
    %797 = vmatprep.subr.mxu0 %v637
    %798 = vmatpush1.msra.mxu0 %v636
    %799 = vmatprep.subr.mxu0 %v641
    %800 = vmatpush1.msra.mxu0 %v640
    %801 = vmatprep.subr.mxu0 %v645
    %802 = vmatpush1.msra.mxu0 %v644
    %803 = vmatprep.subr.mxu0 %v649
    %804 = vmatpush1.msra.mxu0 %v648
    %805 = vmatprep.subr.mxu0 %v653
    %806 = vmatpush1.msra.mxu0 %v652
    %807 = vmatprep.subr.mxu0 %v657
    %808 = vmatpush1.msra.mxu0 %v656
    %809 = vmatprep.subr.mxu0 %v661
    %810 = vmatpush1.msra.mxu0 %v660
    %811 = vmatprep.subr.mxu0 %v665
    %812 = vmatpush1.msra.mxu0 %v664
    %813 = vmatprep.subr.mxu0 %v669
    %814 = vmatpush1.msra.mxu0 %v668
    %815 = vmatprep.subr.mxu0 %v673
    %816 = vmatpush1.msra.mxu0 %v672
    %817 = vmatprep.subr.mxu0 %v677
    %818 = vmatpush1.msra.mxu0 %v676
    %819 = vmatprep.subr.mxu0 %v681
    %820 = vmatpush1.msra.mxu0 %v680
    %821 = vmatprep.subr.mxu0 %v685
    %822 = vmatpush1.msra.mxu0 %v684
    %823 = vmatprep.subr.mxu0 %v689
    %824 = vmatpush1.msra.mxu0 %v688
    %825 = vmatprep.subr.mxu0 %v693
    %826 = vmatpush1.msra.mxu0 %v692
    %827 = vmatprep.subr.mxu0 %v697
    %828 = vmatpush1.msra.mxu0 %v696
    %829 = vmatprep.subr.mxu0 0.0
    %830 = vmatpush1.msra.mxu0 0.0
    %831 = vmatprep.subr.mxu0 0.0
    %832 = vmatpush1.msra.mxu0 0.0
    %833 = vmatprep.subr.mxu0 0.0
    %834 = vmatpush1.msra.mxu0 0.0
    %835 = vmatprep.subr.mxu0 0.0
    %836 = vmatpush1.msra.mxu0 0.0
    %837 = vmatprep.subr.mxu0 0.0
    %838 = vmatpush1.msra.mxu0 0.0
    %839 = vmatprep.subr.mxu0 0.0
    %840 = vmatpush1.msra.mxu0 0.0
    %841 = vmatprep.subr.mxu0 0.0
    %842 = vmatpush1.msra.mxu0 0.0
    %843 = vmatprep.subr.mxu0 0.0
    %844 = vmatpush1.msra.mxu0 0.0
    %845 = vmatprep.subr.mxu0 0.0
    %846 = vmatpush1.msra.mxu0 0.0
    %847 = vmatprep.subr.mxu0 0.0
    %848 = vmatpush1.msra.mxu0 0.0
    %849 = vmatprep.subr.mxu0 0.0
    %850 = vmatpush1.msra.mxu0 0.0
    %851 = vmatprep.subr.mxu0 0.0
    %852 = vmatpush1.msra.mxu0 0.0
    %853 = vmatprep.subr.mxu0 0.0
    %854 = vmatpush1.msra.mxu0 0.0
    %855 = vmatprep.subr.mxu0 0.0
    %856 = vmatpush1.msra.mxu0 0.0
    %857 = vmatprep.subr.mxu0 0.0
    %858 = vmatpush1.msra.mxu0 0.0
    %859 = vmatprep.subr.mxu0 0.0
    %860 = vmatpush1.msra.mxu0 0.0
    %861 = vmatprep.mubr.f32.mxu0 0.0
    %862 = vmatmul.mubr.f32.gmra.mrb[0].mxu0 %v632
    %v863 = vpop.f32.mrb[0].mxu0
    %v864 = vadd.f32 %v711, %v863
    %v865 = vpop.f32.mrb[0].mxu0
    %v866 = vadd.f32 %v715, %v865
    %867 = vmatprep.mubr.f32.mxu0 0.0
    %868 = vmatmul.mubr.f32.gmra.mrb[0].mxu0 %v633
    %v869 = vpop.f32.mrb[0].mxu0
    %v870 = vadd.f32 %v711, %v869
    %v871 = vpop.f32.mrb[0].mxu0
    %v872 = vadd.f32 %v715, %v871
    %873 = vdwg.mxu0
    %874 = vst [vmem:[#allocation2] sm:$0xff] %v382
    %875 = vst [vmem:[#allocation3] sm:$0xff] %v545
    %876 = vst [vmem:[#allocation4] sm:$0xff] %v787
    %877 = vst [vmem:[#allocation2 + $0x8] sm:$0xff] %v383
    %878 = vst [vmem:[#allocation3 + $0x8] sm:$0xff] %v547
    %879 = vst [vmem:[#allocation4 + $0x8] sm:$0xff] %v789
    %880 = vst [vmem:[#allocation2 + $0x10] sm:$0xff] %v384
    %881 = vst [vmem:[#allocation3 + $0x10] sm:$0xff] %v622
    %882 = vst [vmem:[#allocation4 + $0x10] sm:$0xff] %v864
    %883 = vst [vmem:[#allocation2 + $0x18] sm:$0xff] %v385
    %884 = vst [vmem:[#allocation3 + $0x18] sm:$0xff] %v624
    %885 = vst [vmem:[#allocation4 + $0x18] sm:$0xff] %v866
    %v886 = vld [vmem:[#allocation2] sm:$0xff]
    %v887 = vld [vmem:[#allocation2 + $0x8] sm:$0xff]
    %v888 = vld [vmem:[#allocation2 + $0x10] sm:$0xff]
    %v889 = vld [vmem:[#allocation2 + $0x18] sm:$0xff]
    %v890 = vld [vmem:[#allocation3] sm:$0xff]
    %v891 = vld [vmem:[#allocation3 + $0x8] sm:$0xff]
    %v892 = vld [vmem:[#allocation3 + $0x10] sm:$0xff]
    %v893 = vld [vmem:[#allocation3 + $0x18] sm:$0xff]
    %v894 = vld [vmem:[#allocation4] sm:$0xff]
    %v895 = vld [vmem:[#allocation4 + $0x8] sm:$0xff]
    %v896 = vld [vmem:[#allocation4 + $0x10] sm:$0xff]
    %v897 = vld [vmem:[#allocation4 + $0x18] sm:$0xff]
    %898 = vmatprep.subr.mxu0 0.0
    %899 = vmatpush1.xpose.msra.mxu0 %v890
    %900 = vmatprep.subr.mxu0 0.0
    %901 = vmatpush1.xpose.msra.mxu0 %v891
    %902 = vmatprep.subr.mxu0 0.0
    %903 = vmatpush1.xpose.msra.mxu0 %v892
    %904 = vmatprep.subr.mxu0 0.0
    %905 = vmatpush1.xpose.msra.mxu0 %v893
    %906 = vmatprep.subr.mxu0 0.0
    %907 = vmatpush1.xpose.msra.mxu0 0.0
    %908 = vmatprep.subr.mxu0 0.0
    %909 = vmatpush1.xpose.msra.mxu0 0.0
    %910 = vmatprep.subr.mxu0 0.0
    %911 = vmatpush1.xpose.msra.mxu0 0.0
    %912 = vmatprep.subr.mxu0 0.0
    %913 = vmatpush1.xpose.msra.mxu0 0.0
    %914 = vmatprep.subr.mxu0 0.0
    %915 = vmatpush1.xpose.msra.mxu0 0.0
    %916 = vmatprep.subr.mxu0 0.0
    %917 = vmatpush1.xpose.msra.mxu0 0.0
    %918 = vmatprep.subr.mxu0 0.0
    %919 = vmatpush1.xpose.msra.mxu0 0.0
    %920 = vmatprep.subr.mxu0 0.0
    %921 = vmatpush1.xpose.msra.mxu0 0.0
    %922 = vmatprep.subr.mxu0 0.0
    %923 = vmatpush1.xpose.msra.mxu0 0.0
    %924 = vmatprep.subr.mxu0 0.0
    %925 = vmatpush1.xpose.msra.mxu0 0.0
    %926 = vmatprep.subr.mxu0 0.0
    %927 = vmatpush1.xpose.msra.mxu0 0.0
    %928 = vmatprep.subr.mxu0 0.0
    %929 = vmatpush1.xpose.msra.mxu0 0.0
    %930 = vmatprep.subr.mxu0 0.0
    %931 = vmatpush1.xpose.msra.mxu0 0.0
    %932 = vmatprep.subr.mxu0 0.0
    %933 = vmatpush1.xpose.msra.mxu0 0.0
    %934 = vmatprep.subr.mxu0 0.0
    %935 = vmatpush1.xpose.msra.mxu0 0.0
    %936 = vmatprep.subr.mxu0 0.0
    %937 = vmatpush1.xpose.msra.mxu0 0.0
    %938 = vmatprep.subr.mxu0 0.0
    %939 = vmatpush1.xpose.msra.mxu0 0.0
    %940 = vmatprep.subr.mxu0 0.0
    %941 = vmatpush1.xpose.msra.mxu0 0.0
    %942 = vmatprep.subr.mxu0 0.0
    %943 = vmatpush1.xpose.msra.mxu0 0.0
    %944 = vmatprep.subr.mxu0 0.0
    %945 = vmatpush1.xpose.msra.mxu0 0.0
    %946 = vmatprep.subr.mxu0 0.0
    %947 = vmatpush1.xpose.msra.mxu0 0.0
    %948 = vmatprep.subr.mxu0 0.0
    %949 = vmatpush1.xpose.msra.mxu0 0.0
    %950 = vmatprep.subr.mxu0 0.0
    %951 = vmatpush1.xpose.msra.mxu0 0.0
    %952 = vmatprep.subr.mxu0 0.0
    %953 = vmatpush1.xpose.msra.mxu0 0.0
    %954 = vmatprep.subr.mxu0 0.0
    %955 = vmatpush1.xpose.msra.mxu0 0.0
    %956 = vmatprep.subr.mxu0 0.0
    %957 = vmatpush1.xpose.msra.mxu0 0.0
    %958 = vmatprep.subr.mxu0 0.0
    %959 = vmatpush1.xpose.msra.mxu0 0.0
    %960 = vmatprep.subr.mxu0 0.0
    %961 = vmatpush1.xpose.msra.mxu0 0.0
    %962 = vmatprep.mubr.f32.mxu0 0.0
    %963 = vmatmul.mubr.f32.gmra.mrb[0].mxu0 %v886
    %v964 = vpop.f32.mrb[0].mxu0
    %v965 = vadd.f32 0.0, %v964
    %v966 = vpop.f32.mrb[0].mxu0
    %967 = vmatprep.mubr.f32.mxu0 0.0
    %968 = vmatmul.mubr.f32.gmra.mrb[0].mxu0 %v887
    %v969 = vpop.f32.mrb[0].mxu0
    %v970 = vadd.f32 0.0, %v969
    %v971 = vpop.f32.mrb[0].mxu0
    %972 = vmatprep.mubr.f32.mxu0 0.0
    %973 = vmatmul.mubr.f32.gmra.mrb[0].mxu0 %v888
    %v974 = vpop.f32.mrb[0].mxu0
    %v975 = vadd.f32 0.0, %v974
    %v976 = vpop.f32.mrb[0].mxu0
    %977 = vmatprep.mubr.f32.mxu0 0.0
    %978 = vmatmul.mubr.f32.gmra.mrb[0].mxu0 %v889
    %v979 = vpop.f32.mrb[0].mxu0
    %v980 = vadd.f32 0.0, %v979
    %v981 = vpop.f32.mrb[0].mxu0
    %982 = vdwg.mxu0
    %vm983 = vcmask 261120
    %v984 = vsel %vm983, %v965, -inf
    %v985 = vsel %vm983, %v970, -inf
    %v986 = vsel %vm983, %v975, -inf
    %v987 = vsel %vm983, %v980, -inf
    %v988 = vmax.f32 %v984, %v985
    %v989 = vmax.f32 %v986, %v987
    %v990 = vmax.f32 %v988, %v989
    %v991 = vrot.slane %v990, 4
    %v992 = vmax.f32 %v990, %v991
    %v993 = vrot.slane %v992, 2
    %v994 = vmax.f32 %v992, %v993
    %v995 = vrot.slane %v994, 1
    %v996 = vmax.f32 %v994, %v995
    %v997 = vsub.f32 %v965, %v996
    %v998 = vsub.f32 %v970, %v996
    %v999 = vsub.f32 %v975, %v996
    %v1000 = vsub.f32 %v980, %v996
    %v1001 = vmul.f32 %v997, 1.442695
    %v1002 = vpow.pop %v1001
    %v1003 = vmul.f32 %v998, 1.442695
    %v1004 = vpow.pop %v1003
    %v1005 = vmul.f32 %v999, 1.442695
    %v1006 = vpow.pop %v1005
    %v1007 = vmul.f32 %v1000, 1.442695
    %v1008 = vpow.pop %v1007
    %v1009 = vsel %vm983, %v1002, 0.0
    %v1010 = vsel %vm983, %v1004, 0.0
    %v1011 = vadd.f32 %v1009, %v1010
    %v1012 = vsel %vm983, %v1006, 0.0
    %v1013 = vadd.f32 %v1011, %v1012
    %v1014 = vsel %vm983, %v1008, 0.0
    %v1015 = vadd.f32 %v1013, %v1014
    %v1016 = vrot.slane %v1015, 4
    %v1017 = vadd.f32 %v1015, %v1016
    %v1018 = vrot.slane %v1017, 2
    %v1019 = vadd.f32 %v1017, %v1018
    %v1020 = vrot.slane %v1019, 1
    %v1021 = vadd.f32 %v1019, %v1020
    %v1022 = vrcp.pop %v1021
    %v1023 = vmul.f32 %v1002, %v1022
    %v1024 = vmul.f32 %v1004, %v1022
    %v1025 = vmul.f32 %v1006, %v1022
    %v1026 = vmul.f32 %v1008, %v1022
    %v1028 = vsel %vm983, %v1023, 0
    %v1031 = vsel %vm983, %v1024, 0
    %v1034 = vsel %vm983, %v1025, 0
    %v1037 = vsel %vm983, %v1026, 0
    %1039 = vmatprep.subr.mxu0 0.0
    %1040 = vmatpush1.msra.mxu0 %v894
    %1041 = vmatprep.subr.mxu0 0.0
    %1042 = vmatpush1.msra.mxu0 %v895
    %1043 = vmatprep.subr.mxu0 0.0
    %1044 = vmatpush1.msra.mxu0 %v896
    %1045 = vmatprep.subr.mxu0 0.0
    %1046 = vmatpush1.msra.mxu0 %v897
    %1047 = vmatprep.subr.mxu0 0.0
    %1048 = vmatpush1.msra.mxu0 0.0
    %1049 = vmatprep.subr.mxu0 0.0
    %1050 = vmatpush1.msra.mxu0 0.0
    %1051 = vmatprep.subr.mxu0 0.0
    %1052 = vmatpush1.msra.mxu0 0.0
    %1053 = vmatprep.subr.mxu0 0.0
    %1054 = vmatpush1.msra.mxu0 0.0
    %1055 = vmatprep.subr.mxu0 0.0
    %1056 = vmatpush1.msra.mxu0 0.0
    %1057 = vmatprep.subr.mxu0 0.0
    %1058 = vmatpush1.msra.mxu0 0.0
    %1059 = vmatprep.subr.mxu0 0.0
    %1060 = vmatpush1.msra.mxu0 0.0
    %1061 = vmatprep.subr.mxu0 0.0
    %1062 = vmatpush1.msra.mxu0 0.0
    %1063 = vmatprep.subr.mxu0 0.0
    %1064 = vmatpush1.msra.mxu0 0.0
    %1065 = vmatprep.subr.mxu0 0.0
    %1066 = vmatpush1.msra.mxu0 0.0
    %1067 = vmatprep.subr.mxu0 0.0
    %1068 = vmatpush1.msra.mxu0 0.0
    %1069 = vmatprep.subr.mxu0 0.0
    %1070 = vmatpush1.msra.mxu0 0.0
    %1071 = vmatprep.subr.mxu0 0.0
    %1072 = vmatpush1.msra.mxu0 0.0
    %1073 = vmatprep.subr.mxu0 0.0
    %1074 = vmatpush1.msra.mxu0 0.0
    %1075 = vmatprep.subr.mxu0 0.0
    %1076 = vmatpush1.msra.mxu0 0.0
    %1077 = vmatprep.subr.mxu0 0.0
    %1078 = vmatpush1.msra.mxu0 0.0
    %1079 = vmatprep.subr.mxu0 0.0
    %1080 = vmatpush1.msra.mxu0 0.0
    %1081 = vmatprep.subr.mxu0 0.0
    %1082 = vmatpush1.msra.mxu0 0.0
    %1083 = vmatprep.subr.mxu0 0.0
    %1084 = vmatpush1.msra.mxu0 0.0
    %1085 = vmatprep.subr.mxu0 0.0
    %1086 = vmatpush1.msra.mxu0 0.0
    %1087 = vmatprep.subr.mxu0 0.0
    %1088 = vmatpush1.msra.mxu0 0.0
    %1089 = vmatprep.subr.mxu0 0.0
    %1090 = vmatpush1.msra.mxu0 0.0
    %1091 = vmatprep.subr.mxu0 0.0
    %1092 = vmatpush1.msra.mxu0 0.0
    %1093 = vmatprep.subr.mxu0 0.0
    %1094 = vmatpush1.msra.mxu0 0.0
    %1095 = vmatprep.subr.mxu0 0.0
    %1096 = vmatpush1.msra.mxu0 0.0
    %1097 = vmatprep.subr.mxu0 0.0
    %1098 = vmatpush1.msra.mxu0 0.0
    %1099 = vmatprep.subr.mxu0 0.0
    %1100 = vmatpush1.msra.mxu0 0.0
    %1101 = vmatprep.subr.mxu0 0.0
    %1102 = vmatpush1.msra.mxu0 0.0
    %1103 = vmatprep.mubr.f32.mxu0 0.0
    %1104 = vmatmul.mubr.f32.gmra.mrb[0].mxu0 %v1028
    %v1105 = vpop.f32.mrb[0].mxu0
    %v1106 = vadd.f32 0.0, %v1105
    %v1107 = vpop.f32.mrb[0].mxu0
    %1108 = vmatprep.mubr.f32.mxu0 0.0
    %1109 = vmatmul.mubr.f32.gmra.mrb[0].mxu0 %v1031
    %v1110 = vpop.f32.mrb[0].mxu0
    %v1111 = vadd.f32 0.0, %v1110
    %v1112 = vpop.f32.mrb[0].mxu0
    %1113 = vmatprep.mubr.f32.mxu0 0.0
    %1114 = vmatmul.mubr.f32.gmra.mrb[0].mxu0 %v1034
    %v1115 = vpop.f32.mrb[0].mxu0
    %v1116 = vadd.f32 0.0, %v1115
    %v1117 = vpop.f32.mrb[0].mxu0
    %1118 = vmatprep.mubr.f32.mxu0 0.0
    %1119 = vmatmul.mubr.f32.gmra.mrb[0].mxu0 %v1037
    %v1120 = vpop.f32.mrb[0].mxu0
    %v1121 = vadd.f32 0.0, %v1120
    %v1122 = vpop.f32.mrb[0].mxu0
    %1123 = vdwg.mxu0
    %1124 = vst [vmem:[#allocation5] sm:$0xff] %v1106
    %1125 = vst [vmem:[#allocation5 + $0x8] sm:$0xff] %v1111
    %1126 = vst [vmem:[#allocation5 + $0x10] sm:$0xff] %v1116
    %1127 = vst [vmem:[#allocation5 + $0x18] sm:$0xff] %v1121
    %1128 = vst [vmem:[#allocation2] sm:$0xff] %v386
    %1129 = vst [vmem:[#allocation3] sm:$0xff] %v551
    %1130 = vst [vmem:[#allocation4] sm:$0xff] %v793
    %1131 = vst [vmem:[#allocation2 + $0x8] sm:$0xff] %v387
    %1132 = vst [vmem:[#allocation3 + $0x8] sm:$0xff] %v553
    %1133 = vst [vmem:[#allocation4 + $0x8] sm:$0xff] %v795
    %1134 = vst [vmem:[#allocation2 + $0x10] sm:$0xff] %v388
    %1135 = vst [vmem:[#allocation3 + $0x10] sm:$0xff] %v628
    %1136 = vst [vmem:[#allocation4 + $0x10] sm:$0xff] %v870
    %1137 = vst [vmem:[#allocation2 + $0x18] sm:$0xff] %v389
    %1138 = vst [vmem:[#allocation3 + $0x18] sm:$0xff] %v630
    %1139 = vst [vmem:[#allocation4 + $0x18] sm:$0xff] %v872
    %v1140 = vld [vmem:[#allocation2] sm:$0xff]
    %v1141 = vld [vmem:[#allocation2 + $0x8] sm:$0xff]
    %v1142 = vld [vmem:[#allocation2 + $0x10] sm:$0xff]
    %v1143 = vld [vmem:[#allocation2 + $0x18] sm:$0xff]
    %v1144 = vld [vmem:[#allocation3] sm:$0xff]
    %v1145 = vld [vmem:[#allocation3 + $0x8] sm:$0xff]
    %v1146 = vld [vmem:[#allocation3 + $0x10] sm:$0xff]
    %v1147 = vld [vmem:[#allocation3 + $0x18] sm:$0xff]
    %v1148 = vld [vmem:[#allocation4] sm:$0xff]
    %v1149 = vld [vmem:[#allocation4 + $0x8] sm:$0xff]
    %v1150 = vld [vmem:[#allocation4 + $0x10] sm:$0xff]
    %v1151 = vld [vmem:[#allocation4 + $0x18] sm:$0xff]
    %1152 = vmatprep.subr.mxu0 0.0
    %1153 = vmatpush1.xpose.msra.mxu0 %v1144
    %1154 = vmatprep.subr.mxu0 0.0
    %1155 = vmatpush1.xpose.msra.mxu0 %v1145
    %1156 = vmatprep.subr.mxu0 0.0
    %1157 = vmatpush1.xpose.msra.mxu0 %v1146
    %1158 = vmatprep.subr.mxu0 0.0
    %1159 = vmatpush1.xpose.msra.mxu0 %v1147
    %1160 = vmatprep.subr.mxu0 0.0
    %1161 = vmatpush1.xpose.msra.mxu0 0.0
    %1162 = vmatprep.subr.mxu0 0.0
    %1163 = vmatpush1.xpose.msra.mxu0 0.0
    %1164 = vmatprep.subr.mxu0 0.0
    %1165 = vmatpush1.xpose.msra.mxu0 0.0
    %1166 = vmatprep.subr.mxu0 0.0
    %1167 = vmatpush1.xpose.msra.mxu0 0.0
    %1168 = vmatprep.subr.mxu0 0.0
    %1169 = vmatpush1.xpose.msra.mxu0 0.0
    %1170 = vmatprep.subr.mxu0 0.0
    %1171 = vmatpush1.xpose.msra.mxu0 0.0
    %1172 = vmatprep.subr.mxu0 0.0
    %1173 = vmatpush1.xpose.msra.mxu0 0.0
    %1174 = vmatprep.subr.mxu0 0.0
    %1175 = vmatpush1.xpose.msra.mxu0 0.0
    %1176 = vmatprep.subr.mxu0 0.0
    %1177 = vmatpush1.xpose.msra.mxu0 0.0
    %1178 = vmatprep.subr.mxu0 0.0
    %1179 = vmatpush1.xpose.msra.mxu0 0.0
    %1180 = vmatprep.subr.mxu0 0.0
    %1181 = vmatpush1.xpose.msra.mxu0 0.0
    %1182 = vmatprep.subr.mxu0 0.0
    %1183 = vmatpush1.xpose.msra.mxu0 0.0
    %1184 = vmatprep.subr.mxu0 0.0
    %1185 = vmatpush1.xpose.msra.mxu0 0.0
    %1186 = vmatprep.subr.mxu0 0.0
    %1187 = vmatpush1.xpose.msra.mxu0 0.0
    %1188 = vmatprep.subr.mxu0 0.0
    %1189 = vmatpush1.xpose.msra.mxu0 0.0
    %1190 = vmatprep.subr.mxu0 0.0
    %1191 = vmatpush1.xpose.msra.mxu0 0.0
    %1192 = vmatprep.subr.mxu0 0.0
    %1193 = vmatpush1.xpose.msra.mxu0 0.0
    %1194 = vmatprep.subr.mxu0 0.0
    %1195 = vmatpush1.xpose.msra.mxu0 0.0
    %1196 = vmatprep.subr.mxu0 0.0
    %1197 = vmatpush1.xpose.msra.mxu0 0.0
    %1198 = vmatprep.subr.mxu0 0.0
    %1199 = vmatpush1.xpose.msra.mxu0 0.0
    %1200 = vmatprep.subr.mxu0 0.0
    %1201 = vmatpush1.xpose.msra.mxu0 0.0
    %1202 = vmatprep.subr.mxu0 0.0
    %1203 = vmatpush1.xpose.msra.mxu0 0.0
    %1204 = vmatprep.subr.mxu0 0.0
    %1205 = vmatpush1.xpose.msra.mxu0 0.0
    %1206 = vmatprep.subr.mxu0 0.0
    %1207 = vmatpush1.xpose.msra.mxu0 0.0
    %1208 = vmatprep.subr.mxu0 0.0
    %1209 = vmatpush1.xpose.msra.mxu0 0.0
    %1210 = vmatprep.subr.mxu0 0.0
    %1211 = vmatpush1.xpose.msra.mxu0 0.0
    %1212 = vmatprep.subr.mxu0 0.0
    %1213 = vmatpush1.xpose.msra.mxu0 0.0
    %1214 = vmatprep.subr.mxu0 0.0
    %1215 = vmatpush1.xpose.msra.mxu0 0.0
    %1216 = vmatprep.mubr.f32.mxu0 0.0
    %1217 = vmatmul.mubr.f32.gmra.mrb[0].mxu0 %v1140
    %v1218 = vpop.f32.mrb[0].mxu0
    %v1219 = vadd.f32 0.0, %v1218
    %v1220 = vpop.f32.mrb[0].mxu0
    %1221 = vmatprep.mubr.f32.mxu0 0.0
    %1222 = vmatmul.mubr.f32.gmra.mrb[0].mxu0 %v1141
    %v1223 = vpop.f32.mrb[0].mxu0
    %v1224 = vadd.f32 0.0, %v1223
    %v1225 = vpop.f32.mrb[0].mxu0
    %1226 = vmatprep.mubr.f32.mxu0 0.0
    %1227 = vmatmul.mubr.f32.gmra.mrb[0].mxu0 %v1142
    %v1228 = vpop.f32.mrb[0].mxu0
    %v1229 = vadd.f32 0.0, %v1228
    %v1230 = vpop.f32.mrb[0].mxu0
    %1231 = vmatprep.mubr.f32.mxu0 0.0
    %1232 = vmatmul.mubr.f32.gmra.mrb[0].mxu0 %v1143
    %v1233 = vpop.f32.mrb[0].mxu0
    %v1234 = vadd.f32 0.0, %v1233
    %v1235 = vpop.f32.mrb[0].mxu0
    %1236 = vdwg.mxu0
    %v1237 = vsel %vm983, %v1219, -inf
    %v1238 = vsel %vm983, %v1224, -inf
    %v1239 = vsel %vm983, %v1229, -inf
    %v1240 = vsel %vm983, %v1234, -inf
    %v1241 = vmax.f32 %v1237, %v1238
    %v1242 = vmax.f32 %v1239, %v1240
    %v1243 = vmax.f32 %v1241, %v1242
    %v1244 = vrot.slane %v1243, 4
    %v1245 = vmax.f32 %v1243, %v1244
    %v1246 = vrot.slane %v1245, 2
    %v1247 = vmax.f32 %v1245, %v1246
    %v1248 = vrot.slane %v1247, 1
    %v1249 = vmax.f32 %v1247, %v1248
    %v1250 = vsub.f32 %v1219, %v1249
    %v1251 = vsub.f32 %v1224, %v1249
    %v1252 = vsub.f32 %v1229, %v1249
    %v1253 = vsub.f32 %v1234, %v1249
    %v1254 = vmul.f32 %v1250, 1.442695
    %v1255 = vpow.pop %v1254
    %v1256 = vmul.f32 %v1251, 1.442695
    %v1257 = vpow.pop %v1256
    %v1258 = vmul.f32 %v1252, 1.442695
    %v1259 = vpow.pop %v1258
    %v1260 = vmul.f32 %v1253, 1.442695
    %v1261 = vpow.pop %v1260
    %v1262 = vsel %vm983, %v1255, 0.0
    %v1263 = vsel %vm983, %v1257, 0.0
    %v1264 = vadd.f32 %v1262, %v1263
    %v1265 = vsel %vm983, %v1259, 0.0
    %v1266 = vadd.f32 %v1264, %v1265
    %v1267 = vsel %vm983, %v1261, 0.0
    %v1268 = vadd.f32 %v1266, %v1267
    %v1269 = vrot.slane %v1268, 4
    %v1270 = vadd.f32 %v1268, %v1269
    %v1271 = vrot.slane %v1270, 2
    %v1272 = vadd.f32 %v1270, %v1271
    %v1273 = vrot.slane %v1272, 1
    %v1274 = vadd.f32 %v1272, %v1273
    %v1275 = vrcp.pop %v1274
    %v1276 = vmul.f32 %v1255, %v1275
    %v1277 = vmul.f32 %v1257, %v1275
    %v1278 = vmul.f32 %v1259, %v1275
    %v1279 = vmul.f32 %v1261, %v1275
    %v1281 = vsel %vm983, %v1276, 0
    %v1284 = vsel %vm983, %v1277, 0
    %v1287 = vsel %vm983, %v1278, 0
    %v1290 = vsel %vm983, %v1279, 0
    %1292 = vmatprep.subr.mxu0 0.0
    %1293 = vmatpush1.msra.mxu0 %v1148
    %1294 = vmatprep.subr.mxu0 0.0
    %1295 = vmatpush1.msra.mxu0 %v1149
    %1296 = vmatprep.subr.mxu0 0.0
    %1297 = vmatpush1.msra.mxu0 %v1150
    %1298 = vmatprep.subr.mxu0 0.0
    %1299 = vmatpush1.msra.mxu0 %v1151
    %1300 = vmatprep.subr.mxu0 0.0
    %1301 = vmatpush1.msra.mxu0 0.0
    %1302 = vmatprep.subr.mxu0 0.0
    %1303 = vmatpush1.msra.mxu0 0.0
    %1304 = vmatprep.subr.mxu0 0.0
    %1305 = vmatpush1.msra.mxu0 0.0
    %1306 = vmatprep.subr.mxu0 0.0
    %1307 = vmatpush1.msra.mxu0 0.0
    %1308 = vmatprep.subr.mxu0 0.0
    %1309 = vmatpush1.msra.mxu0 0.0
    %1310 = vmatprep.subr.mxu0 0.0
    %1311 = vmatpush1.msra.mxu0 0.0
    %1312 = vmatprep.subr.mxu0 0.0
    %1313 = vmatpush1.msra.mxu0 0.0
    %1314 = vmatprep.subr.mxu0 0.0
    %1315 = vmatpush1.msra.mxu0 0.0
    %1316 = vmatprep.subr.mxu0 0.0
    %1317 = vmatpush1.msra.mxu0 0.0
    %1318 = vmatprep.subr.mxu0 0.0
    %1319 = vmatpush1.msra.mxu0 0.0
    %1320 = vmatprep.subr.mxu0 0.0
    %1321 = vmatpush1.msra.mxu0 0.0
    %1322 = vmatprep.subr.mxu0 0.0
    %1323 = vmatpush1.msra.mxu0 0.0
    %1324 = vmatprep.subr.mxu0 0.0
    %1325 = vmatpush1.msra.mxu0 0.0
    %1326 = vmatprep.subr.mxu0 0.0
    %1327 = vmatpush1.msra.mxu0 0.0
    %1328 = vmatprep.subr.mxu0 0.0
    %1329 = vmatpush1.msra.mxu0 0.0
    %1330 = vmatprep.subr.mxu0 0.0
    %1331 = vmatpush1.msra.mxu0 0.0
    %1332 = vmatprep.subr.mxu0 0.0
    %1333 = vmatpush1.msra.mxu0 0.0
    %1334 = vmatprep.subr.mxu0 0.0
    %1335 = vmatpush1.msra.mxu0 0.0
    %1336 = vmatprep.subr.mxu0 0.0
    %1337 = vmatpush1.msra.mxu0 0.0
    %1338 = vmatprep.subr.mxu0 0.0
    %1339 = vmatpush1.msra.mxu0 0.0
    %1340 = vmatprep.subr.mxu0 0.0
    %1341 = vmatpush1.msra.mxu0 0.0
    %1342 = vmatprep.subr.mxu0 0.0
    %1343 = vmatpush1.msra.mxu0 0.0
    %1344 = vmatprep.subr.mxu0 0.0
    %1345 = vmatpush1.msra.mxu0 0.0
    %1346 = vmatprep.subr.mxu0 0.0
    %1347 = vmatpush1.msra.mxu0 0.0
    %1348 = vmatprep.subr.mxu0 0.0
    %1349 = vmatpush1.msra.mxu0 0.0
    %1350 = vmatprep.subr.mxu0 0.0
    %1351 = vmatpush1.msra.mxu0 0.0
    %1352 = vmatprep.subr.mxu0 0.0
    %1353 = vmatpush1.msra.mxu0 0.0
    %1354 = vmatprep.subr.mxu0 0.0
    %1355 = vmatpush1.msra.mxu0 0.0
    %1356 = vmatprep.mubr.f32.mxu0 0.0
    %1357 = vmatmul.mubr.f32.gmra.mrb[0].mxu0 %v1281
    %v1358 = vpop.f32.mrb[0].mxu0
    %v1359 = vadd.f32 0.0, %v1358
    %v1360 = vpop.f32.mrb[0].mxu0
    %1361 = vmatprep.mubr.f32.mxu0 0.0
    %1362 = vmatmul.mubr.f32.gmra.mrb[0].mxu0 %v1284
    %v1363 = vpop.f32.mrb[0].mxu0
    %v1364 = vadd.f32 0.0, %v1363
    %v1365 = vpop.f32.mrb[0].mxu0
    %1366 = vmatprep.mubr.f32.mxu0 0.0
    %1367 = vmatmul.mubr.f32.gmra.mrb[0].mxu0 %v1287
    %v1368 = vpop.f32.mrb[0].mxu0
    %v1369 = vadd.f32 0.0, %v1368
    %v1370 = vpop.f32.mrb[0].mxu0
    %1371 = vmatprep.mubr.f32.mxu0 0.0
    %1372 = vmatmul.mubr.f32.gmra.mrb[0].mxu0 %v1290
    %v1373 = vpop.f32.mrb[0].mxu0
    %v1374 = vadd.f32 0.0, %v1373
    %v1375 = vpop.f32.mrb[0].mxu0
    %1376 = vdwg.mxu0
    %1377 = vst [vmem:[#allocation5 + $0x20] sm:$0xff] %v1359
    %1378 = vst [vmem:[#allocation5 + $0x28] sm:$0xff] %v1364
    %1379 = vst [vmem:[#allocation5 + $0x30] sm:$0xff] %v1369
    %1380 = vst [vmem:[#allocation5 + $0x38] sm:$0xff] %v1374
    %v1381 = vld [vmem:[#allocation5] sm:$0xff]
    %v1382 = vld [vmem:[#allocation5 + $0x8] sm:$0xff]
    %v1383 = vld [vmem:[#allocation5 + $0x10] sm:$0xff]
    %v1384 = vld [vmem:[#allocation5 + $0x18] sm:$0xff]
    %v1385 = vld [vmem:[#allocation5 + $0x20] sm:$0xff]
    %v1386 = vld [vmem:[#allocation5 + $0x28] sm:$0xff]
    %v1387 = vld [vmem:[#allocation5 + $0x30] sm:$0xff]
    %v1388 = vld [vmem:[#allocation5 + $0x38] sm:$0xff]
    %v1389 = vld [vmem:[#allocation17] sm:$0xff]
    %v1390 = vld [vmem:[#allocation17 + $0x8] sm:$0xff]
    %v1391 = vld [vmem:[#allocation17 + $0x10] sm:$0xff]
    %v1392 = vld [vmem:[#allocation17 + $0x18] sm:$0xff]
    %v1393 = vld [vmem:[#allocation17 + $0x20] sm:$0xff]
    %v1394 = vld [vmem:[#allocation17 + $0x28] sm:$0xff]
    %v1395 = vld [vmem:[#allocation17 + $0x30] sm:$0xff]
    %v1396 = vld [vmem:[#allocation17 + $0x38] sm:$0xff]
    %v1397 = vld [vmem:[#allocation17 + $0x40] sm:$0xff]
    %v1398 = vld [vmem:[#allocation17 + $0x48] sm:$0xff]
    %v1399 = vld [vmem:[#allocation17 + $0x50] sm:$0xff]
    %v1400 = vld [vmem:[#allocation17 + $0x58] sm:$0xff]
    %v1401 = vld [vmem:[#allocation17 + $0x60] sm:$0xff]
    %v1402 = vld [vmem:[#allocation17 + $0x68] sm:$0xff]
    %v1403 = vld [vmem:[#allocation17 + $0x70] sm:$0xff]
    %v1404 = vld [vmem:[#allocation17 + $0x78] sm:$0xff]
    %v1405 = vld [vmem:[#allocation17 + $0x80] sm:$0xff]
    %v1406 = vld [vmem:[#allocation17 + $0x88] sm:$0xff]
    %v1407 = vld [vmem:[#allocation17 + $0x90] sm:$0xff]
    %v1408 = vld [vmem:[#allocation17 + $0x98] sm:$0xff]
    %v1409 = vld [vmem:[#allocation17 + $0xa0] sm:$0xff]
    %v1410 = vld [vmem:[#allocation17 + $0xa8] sm:$0xff]
    %v1411 = vld [vmem:[#allocation17 + $0xb0] sm:$0xff]
    %v1412 = vld [vmem:[#allocation17 + $0xb8] sm:$0xff]
    %v1413 = vld [vmem:[#allocation17 + $0xc0] sm:$0xff]
    %v1414 = vld [vmem:[#allocation17 + $0xc8] sm:$0xff]
    %v1415 = vld [vmem:[#allocation17 + $0xd0] sm:$0xff]
    %v1416 = vld [vmem:[#allocation17 + $0xd8] sm:$0xff]
    %v1417 = vld [vmem:[#allocation17 + $0xe0] sm:$0xff]
    %v1418 = vld [vmem:[#allocation17 + $0xe8] sm:$0xff]
    %v1419 = vld [vmem:[#allocation17 + $0xf0] sm:$0xff]
    %v1420 = vld [vmem:[#allocation17 + $0xf8] sm:$0xff]
    %v1421 = vld [vmem:[#allocation17 + $0x100] sm:$0xff]
    %v1422 = vld [vmem:[#allocation17 + $0x108] sm:$0xff]
    %v1423 = vld [vmem:[#allocation17 + $0x110] sm:$0xff]
    %v1424 = vld [vmem:[#allocation17 + $0x118] sm:$0xff]
    %v1425 = vld [vmem:[#allocation17 + $0x120] sm:$0xff]
    %v1426 = vld [vmem:[#allocation17 + $0x128] sm:$0xff]
    %v1427 = vld [vmem:[#allocation17 + $0x130] sm:$0xff]
    %v1428 = vld [vmem:[#allocation17 + $0x138] sm:$0xff]
    %v1429 = vld [vmem:[#allocation17 + $0x140] sm:$0xff]
    %v1430 = vld [vmem:[#allocation17 + $0x148] sm:$0xff]
    %v1431 = vld [vmem:[#allocation17 + $0x150] sm:$0xff]
    %v1432 = vld [vmem:[#allocation17 + $0x158] sm:$0xff]
    %v1433 = vld [vmem:[#allocation17 + $0x160] sm:$0xff]
    %v1434 = vld [vmem:[#allocation17 + $0x168] sm:$0xff]
    %v1435 = vld [vmem:[#allocation17 + $0x170] sm:$0xff]
    %v1436 = vld [vmem:[#allocation17 + $0x178] sm:$0xff]
    %v1437 = vld [vmem:[#allocation17 + $0x180] sm:$0xff]
    %v1438 = vld [vmem:[#allocation17 + $0x188] sm:$0xff]
    %v1439 = vld [vmem:[#allocation17 + $0x190] sm:$0xff]
    %v1440 = vld [vmem:[#allocation17 + $0x198] sm:$0xff]
    %v1441 = vld [vmem:[#allocation17 + $0x1a0] sm:$0xff]
    %v1442 = vld [vmem:[#allocation17 + $0x1a8] sm:$0xff]
    %v1443 = vld [vmem:[#allocation17 + $0x1b0] sm:$0xff]
    %v1444 = vld [vmem:[#allocation17 + $0x1b8] sm:$0xff]
    %v1445 = vld [vmem:[#allocation17 + $0x1c0] sm:$0xff]
    %v1446 = vld [vmem:[#allocation17 + $0x1c8] sm:$0xff]
    %v1447 = vld [vmem:[#allocation17 + $0x1d0] sm:$0xff]
    %v1448 = vld [vmem:[#allocation17 + $0x1d8] sm:$0xff]
    %v1449 = vld [vmem:[#allocation17 + $0x1e0] sm:$0xff]
    %v1450 = vld [vmem:[#allocation17 + $0x1e8] sm:$0xff]
    %v1451 = vld [vmem:[#allocation17 + $0x1f0] sm:$0xff]
    %v1452 = vld [vmem:[#allocation17 + $0x1f8] sm:$0xff]
    %v1453 = vld [vmem:[%s10] sm:$0x1]
    %v1455 = vlaneseq
    %v1456 = vshrl.u32 %v1455, 7
    %v1457 = vsub.s32 0, %v1456
    %v1458 = vrot.slane %v1453, %v1457
    %1460 = vmatprep.subr.mxu0 0.0
    %1461 = vmatpush1.msra.mxu0 %v1389
    %1462 = vmatprep.subr.mxu0 0.0
    %1463 = vmatpush1.msra.mxu0 %v1390
    %1464 = vmatprep.subr.mxu0 0.0
    %1465 = vmatpush1.msra.mxu0 %v1391
    %1466 = vmatprep.subr.mxu0 0.0
    %1467 = vmatpush1.msra.mxu0 %v1392
    %1468 = vmatprep.subr.mxu0 0.0
    %1469 = vmatpush1.msra.mxu0 %v1393
    %1470 = vmatprep.subr.mxu0 0.0
    %1471 = vmatpush1.msra.mxu0 %v1394
    %1472 = vmatprep.subr.mxu0 0.0
    %1473 = vmatpush1.msra.mxu0 %v1395
    %1474 = vmatprep.subr.mxu0 0.0
    %1475 = vmatpush1.msra.mxu0 %v1396
    %1476 = vmatprep.subr.mxu0 0.0
    %1477 = vmatpush1.msra.mxu0 %v1397
    %1478 = vmatprep.subr.mxu0 0.0
    %1479 = vmatpush1.msra.mxu0 %v1398
    %1480 = vmatprep.subr.mxu0 0.0
    %1481 = vmatpush1.msra.mxu0 %v1399
    %1482 = vmatprep.subr.mxu0 0.0
    %1483 = vmatpush1.msra.mxu0 %v1400
    %1484 = vmatprep.subr.mxu0 0.0
    %1485 = vmatpush1.msra.mxu0 %v1401
    %1486 = vmatprep.subr.mxu0 0.0
    %1487 = vmatpush1.msra.mxu0 %v1402
    %1488 = vmatprep.subr.mxu0 0.0
    %1489 = vmatpush1.msra.mxu0 %v1403
    %1490 = vmatprep.subr.mxu0 0.0
    %1491 = vmatpush1.msra.mxu0 %v1404
    %1492 = vmatprep.subr.mxu0 0.0
    %1493 = vmatpush1.msra.mxu0 %v1405
    %1494 = vmatprep.subr.mxu0 0.0
    %1495 = vmatpush1.msra.mxu0 %v1406
    %1496 = vmatprep.subr.mxu0 0.0
    %1497 = vmatpush1.msra.mxu0 %v1407
    %1498 = vmatprep.subr.mxu0 0.0
    %1499 = vmatpush1.msra.mxu0 %v1408
    %1500 = vmatprep.subr.mxu0 0.0
    %1501 = vmatpush1.msra.mxu0 %v1409
    %1502 = vmatprep.subr.mxu0 0.0
    %1503 = vmatpush1.msra.mxu0 %v1410
    %1504 = vmatprep.subr.mxu0 0.0
    %1505 = vmatpush1.msra.mxu0 %v1411
    %1506 = vmatprep.subr.mxu0 0.0
    %1507 = vmatpush1.msra.mxu0 %v1412
    %1508 = vmatprep.subr.mxu0 0.0
    %1509 = vmatpush1.msra.mxu0 %v1413
    %1510 = vmatprep.subr.mxu0 0.0
    %1511 = vmatpush1.msra.mxu0 %v1414
    %1512 = vmatprep.subr.mxu0 0.0
    %1513 = vmatpush1.msra.mxu0 %v1415
    %1514 = vmatprep.subr.mxu0 0.0
    %1515 = vmatpush1.msra.mxu0 %v1416
    %1516 = vmatprep.subr.mxu0 0.0
    %1517 = vmatpush1.msra.mxu0 %v1417
    %1518 = vmatprep.subr.mxu0 0.0
    %1519 = vmatpush1.msra.mxu0 %v1418
    %1520 = vmatprep.subr.mxu0 0.0
    %1521 = vmatpush1.msra.mxu0 %v1419
    %1522 = vmatprep.subr.mxu0 0.0
    %1523 = vmatpush1.msra.mxu0 %v1420
    %1524 = vmatprep.mubr.f32.mxu0 %v1382
    %1525 = vmatmul.mubr.f32.gmra.mrb[0].mxu0 %v1381
    %v1526 = vpop.f32.mrb[0].mxu0
    %v1527 = vadd.f32 %v1458, %v1526
    %v1528 = vpop.f32.mrb[0].mxu0
    %1529 = vmatprep.mubr.f32.mxu0 %v1386
    %1530 = vmatmul.mubr.f32.gmra.mrb[0].mxu0 %v1385
    %v1531 = vpop.f32.mrb[0].mxu0
    %v1532 = vadd.f32 %v1458, %v1531
    %v1533 = vpop.f32.mrb[0].mxu0
    %1534 = vdwg.mxu0
    %1535 = vmatprep.subr.mxu0 0.0
    %1536 = vmatpush1.msra.mxu0 %v1421
    %1537 = vmatprep.subr.mxu0 0.0
    %1538 = vmatpush1.msra.mxu0 %v1422
    %1539 = vmatprep.subr.mxu0 0.0
    %1540 = vmatpush1.msra.mxu0 %v1423
    %1541 = vmatprep.subr.mxu0 0.0
    %1542 = vmatpush1.msra.mxu0 %v1424
    %1543 = vmatprep.subr.mxu0 0.0
    %1544 = vmatpush1.msra.mxu0 %v1425
    %1545 = vmatprep.subr.mxu0 0.0
    %1546 = vmatpush1.msra.mxu0 %v1426
    %1547 = vmatprep.subr.mxu0 0.0
    %1548 = vmatpush1.msra.mxu0 %v1427
    %1549 = vmatprep.subr.mxu0 0.0
    %1550 = vmatpush1.msra.mxu0 %v1428
    %1551 = vmatprep.subr.mxu0 0.0
    %1552 = vmatpush1.msra.mxu0 %v1429
    %1553 = vmatprep.subr.mxu0 0.0
    %1554 = vmatpush1.msra.mxu0 %v1430
    %1555 = vmatprep.subr.mxu0 0.0
    %1556 = vmatpush1.msra.mxu0 %v1431
    %1557 = vmatprep.subr.mxu0 0.0
    %1558 = vmatpush1.msra.mxu0 %v1432
    %1559 = vmatprep.subr.mxu0 0.0
    %1560 = vmatpush1.msra.mxu0 %v1433
    %1561 = vmatprep.subr.mxu0 0.0
    %1562 = vmatpush1.msra.mxu0 %v1434
    %1563 = vmatprep.subr.mxu0 0.0
    %1564 = vmatpush1.msra.mxu0 %v1435
    %1565 = vmatprep.subr.mxu0 0.0
    %1566 = vmatpush1.msra.mxu0 %v1436
    %1567 = vmatprep.subr.mxu0 0.0
    %1568 = vmatpush1.msra.mxu0 %v1437
    %1569 = vmatprep.subr.mxu0 0.0
    %1570 = vmatpush1.msra.mxu0 %v1438
    %1571 = vmatprep.subr.mxu0 0.0
    %1572 = vmatpush1.msra.mxu0 %v1439
    %1573 = vmatprep.subr.mxu0 0.0
    %1574 = vmatpush1.msra.mxu0 %v1440
    %1575 = vmatprep.subr.mxu0 0.0
    %1576 = vmatpush1.msra.mxu0 %v1441
    %1577 = vmatprep.subr.mxu0 0.0
    %1578 = vmatpush1.msra.mxu0 %v1442
    %1579 = vmatprep.subr.mxu0 0.0
    %1580 = vmatpush1.msra.mxu0 %v1443
    %1581 = vmatprep.subr.mxu0 0.0
    %1582 = vmatpush1.msra.mxu0 %v1444
    %1583 = vmatprep.subr.mxu0 0.0
    %1584 = vmatpush1.msra.mxu0 %v1445
    %1585 = vmatprep.subr.mxu0 0.0
    %1586 = vmatpush1.msra.mxu0 %v1446
    %1587 = vmatprep.subr.mxu0 0.0
    %1588 = vmatpush1.msra.mxu0 %v1447
    %1589 = vmatprep.subr.mxu0 0.0
    %1590 = vmatpush1.msra.mxu0 %v1448
    %1591 = vmatprep.subr.mxu0 0.0
    %1592 = vmatpush1.msra.mxu0 %v1449
    %1593 = vmatprep.subr.mxu0 0.0
    %1594 = vmatpush1.msra.mxu0 %v1450
    %1595 = vmatprep.subr.mxu0 0.0
    %1596 = vmatpush1.msra.mxu0 %v1451
    %1597 = vmatprep.subr.mxu0 0.0
    %1598 = vmatpush1.msra.mxu0 %v1452
    %1599 = vmatprep.mubr.f32.mxu0 %v1384
    %1600 = vmatmul.mubr.f32.gmra.mrb[0].mxu0 %v1383
    %v1601 = vpop.f32.mrb[0].mxu0
    %v1602 = vadd.f32 %v1527, %v1601
    %v1603 = vpop.f32.mrb[0].mxu0
    %1604 = vmatprep.mubr.f32.mxu0 %v1388
    %1605 = vmatmul.mubr.f32.gmra.mrb[0].mxu0 %v1387
    %v1606 = vpop.f32.mrb[0].mxu0
    %v1607 = vadd.f32 %v1532, %v1606
    %v1608 = vpop.f32.mrb[0].mxu0
    %1609 = vdwg.mxu0
    %v1610 = vadd.f32 %v1602, 2.0
    %v1611 = vadd.f32 %v1607, 2.0
    %1612 = vadd.xlane.f32.xlu0 %v1610
    %v1613 = vpop.xlane.xlu0 %1612
    %1614 = vadd.xlane.f32.xlu0 %v1611
    %v1615 = vpop.xlane.xlu0 %1614
    %v1616 = vrcp.pop 128.0
    %v1617 = vmul.f32 %v1613, %v1616
    %v1618 = vmul.f32 %v1615, %v1616
    %v1619 = vsub.f32 %v1610, %v1617
    %v1620 = vsub.f32 %v1611, %v1618
    %v1621 = vmul.f32 %v1619, %v1619
    %v1622 = vmul.f32 %v1620, %v1620
    %1623 = vadd.xlane.f32.xlu0 %v1621
    %v1624 = vpop.xlane.xlu0 %1623
    %1625 = vadd.xlane.f32.xlu0 %v1622
    %v1626 = vpop.xlane.xlu0 %1625
    %v1627 = vmul.f32 %v1624, %v1616
    %v1628 = vmul.f32 %v1626, %v1616
    %v1629 = vadd.f32 %v1627, 1e-05
    %v1630 = vadd.f32 %v1628, 1e-05
    %v1631 = vrsqrt.pop %v1629
    %v1632 = vrsqrt.pop %v1630
    %v1633 = vmul.f32 %v1619, %v1631
    %v1634 = vmul.f32 %v1620, %v1632
    %v1635 = vld [vmem:[%s11] sm:$0x1]
    %v1637 = vlaneseq
    %v1638 = vshrl.u32 %v1637, 7
    %v1639 = vsub.s32 0, %v1638
    %v1640 = vrot.slane %v1635, %v1639
    %v1642 = vmul.f32 %v1633, %v1640
    %v1643 = vmul.f32 %v1634, %v1640
    %v1644 = vld [vmem:[%s12] sm:$0x1]
    %v1646 = vlaneseq
    %v1647 = vshrl.u32 %v1646, 7
    %v1648 = vsub.s32 0, %v1647
    %v1649 = vrot.slane %v1644, %v1648
    %v1651 = vadd.f32 %v1642, %v1649
    %v1652 = vadd.f32 %v1643, %v1649
    %1653 = vst [vmem:[#allocation18] sm:$0xff] %v1651
    %1654 = vst [vmem:[#allocation18 + $0x8] sm:$0xff] %v1652
    // Predicated region
    $region82: #{tpu_custom_call.1} parent=1 // pred_check
      _
    $region83: #{tpu_custom_call.1} parent=1 // pred_check_branch
      %1656 = sbr.rel (0) target = $region85
    $region84: #{tpu_custom_call.1} parent=1 // pred_region
      %s1658 = ssub.s32 256, 256
      %1659 = vsyncadd [#allocation8], %s1658
      %s1660 = sshll.u32 [#allocation18], 4
      %s1661 = int_to_ptr.vmem [resolvable:$true] %s1660
      %1666 = dma.vmem_to_hbm [thread:$0]  %s1661, 256, %s13, [#allocation8], 128, 128, 8
    $region85: #{tpu_custom_call.1} parent=1 // pred_fallthru
      _
    // Predicated region
    $region86: #{tpu_custom_call.1} parent=1 // pred_check
      _
    $region87: #{tpu_custom_call.1} parent=1 // pred_check_branch
      %1668 = sbr.rel (0) target = $region89
    $region88: #{tpu_custom_call.1} parent=1 // pred_region
      %1669 = dma.done [#allocation8], 256
    $region89: #{tpu_custom_call.1} parent=1 // pred_fallthru
      _
    %1670 = vsyncpa [#allocation7], 1
    %1671 = vsyncpa [#allocation10], 1
    %1672 = vsyncpa [#allocation13], 1
    %1673 = vsyncpa [#allocation16], 1
    %1674 = vsyncpa [#allocation8], 1

</llo_original>
